<compile_context>
chip_gen: v7x
topology: tpu7x:2x2x1
jax: 0.10.0
libtpu: 0.0.40
codegen_flags: <defaults>
</compile_context>

<pallas_src>
import functools

import jax
import jax.numpy as jnp
from jax import lax
from jax.experimental import pallas as pl
from jax.experimental.pallas import tpu as pltpu


def _round_up(n: int, m: int) -> int:
    return (n + m - 1) // m * m


def _feat_pad(d: int) -> int:
    # Lane-dense (>=128); 256-align above 256 so the v6e/v7x 256x256 MXU passes are full.
    align = 256 if d > 256 else 128
    return _round_up(d, align)


def _mlp_kernel(*refs, num_linear: int, eps: float):
    """Fused LayerNorm + num_linear Linear layers (ReLU between them) on one batch tile.

    refs = (x, gamma, beta, w1, b1, ..., wN, bN, out)
    """
    x_ref, g_ref, beta_ref = refs[0], refs[1], refs[2]
    o_ref = refs[-1]
    wb = refs[3:-1]

    # Hoist grid-invariant params once per tile (JAX does not CSE broadcasts).
    g = g_ref[...]
    beta = beta_ref[...]

    x = x_ref[...].astype(jnp.float32)

    # ---- LayerNorm (two-pass variance; clamp guards rsqrt against tiny negative rounding). ----
    mean = jnp.mean(x, axis=-1, keepdims=True)
    var = jnp.mean(jnp.square(x - mean), axis=-1, keepdims=True)
    h = (x - mean) * lax.rsqrt(jnp.maximum(var, 0.0) + eps)
    h = h * g + beta

    # ---- Linear / ReLU stack.  Padded weight cols & bias lanes are zero -> padded lanes of h
    #      stay zero, so padded K rows of the next weight never contribute. ----
    for l in range(num_linear):
        w_ref = wb[2 * l]
        b_ref = wb[2 * l + 1]
        h = jnp.dot(h.astype(w_ref.dtype), w_ref[...],
                    preferred_element_type=jnp.float32) + b_ref[...]
        if l + 1 < num_linear:
            h = jnp.maximum(h, 0.0)  # ReLU; Dropout(p=0.0) is identity.
            # TODO(synk): dropout with p > 0 would use pltpu.prng_seed + pltpu.prng_random_bits.

    o_ref[...] = h.astype(o_ref.dtype)


def prepare_params(gamma, beta, weights, biases, matmul_dtype=jnp.bfloat16):
    """One-time parameter prep (feature padding + matmul-dtype cast), outside the per-call path.

    weights[l] has shape (fan_in, fan_out) so y = x @ W + b.
    """
    weights, biases = list(weights), list(biases)
    in_dim = weights[0].shape[0]
    g_p = jnp.asarray(gamma, jnp.float32).reshape(1, in_dim)
    b_p = jnp.asarray(beta, jnp.float32).reshape(1, in_dim)

    w_ps, bias_ps = [], []
    prev_p = in_dim  # x's feature dim is NOT padded (full-extent last-dim block).
    for w, b in zip(weights, biases):
        fin, fout = w.shape
        fout_p = _feat_pad(fout)
        w_p = jnp.zeros((prev_p, fout_p), matmul_dtype).at[:fin, :fout].set(
            jnp.asarray(w, matmul_dtype))
        bias_p = jnp.zeros((1, fout_p), jnp.float32).at[:, :fout].set(
            jnp.asarray(b, jnp.float32).reshape(1, fout))
        w_ps.append(w_p)
        bias_ps.append(bias_p)
        prev_p = fout_p
    return g_p, b_p, tuple(w_ps), tuple(bias_ps)


@functools.partial(jax.jit, static_argnames=("out_dim", "block_b"))
def mlp_forward(x, gamma_p, beta_p, weights_p, biases_p, *, out_dim, block_b=512):
    """Fused MLP forward.  x: (..., in_dim).  Params come from prepare_params()."""
    in_dim = gamma_p.shape[-1]
    orig_shape = x.shape
    x2 = x.reshape(-1, in_dim)
    B = x2.shape[0]
    out_p = biases_p[-1].shape[-1]
    num_linear = len(weights_p)

    # Batch tile: large (amortizes ~0.35us/step), multiple of 8, and chosen so the batch grid has
    # >=2 tiles whenever possible (v7x has 2 TensorCores sharing the "parallel" axis).
    bb = max(_round_up(min(block_b, _round_up(B, 8)), 8), 8)
    if B > 8 and pl.cdiv(B, bb) < 2:
        bb = max(_round_up(pl.cdiv(B, 2), 8), 8)
    grid = (pl.cdiv(B, bb),)

    # VMEM budget: params single-buffered, x/out double-buffered, plus f32 intermediates.
    param_bytes = sum(int(a.size) * a.dtype.itemsize
                      for a in (gamma_p, beta_p, *weights_p, *biases_p))
    max_feat = max([in_dim] + [int(b.shape[-1]) for b in biases_p])
    io_bytes = 2 * bb * (in_dim + out_p) * x.dtype.itemsize
    vmem_need = param_bytes + io_bytes + 3 * bb * max_feat * 4
    try:  # generation-aware cap: never request more than physical VMEM - 8 MiB (v7x = 64 MiB).
        cap = int(getattr(pltpu.get_tpu_info(), "vmem_capacity_bytes", 64 << 20)) - (8 << 20)
    except Exception:
        cap = 56 << 20
    vmem_limit = int(min(max(int(1.25 * vmem_need), 32 << 20), max(cap, 32 << 20)))

    def invariant(shape):
        # Grid-invariant operands: single-buffer them (double-buffering buys nothing and doubles
        # their VMEM footprint).
        idx = lambda i: (0,) * len(shape)
        try:
            return pl.BlockSpec(shape, idx, pipeline_mode=pl.Buffered(1))
        except TypeError:  # older jax without pipeline_mode kwarg
            return pl.BlockSpec(shape, idx)

    in_specs = [
        pl.BlockSpec((bb, in_dim), lambda i: (i, 0)),  # x: tiled over batch, full-extent features
        invariant((1, in_dim)),                        # gamma
        invariant((1, in_dim)),                        # beta
    ]
    kernel_args = [x2, gamma_p, beta_p]
    for w, b in zip(weights_p, biases_p):
        in_specs.append(invariant(w.shape))
        in_specs.append(invariant(b.shape))
        kernel_args.extend((w, b))

    out_padded = pl.pallas_call(
        functools.partial(_mlp_kernel, num_linear=num_linear, eps=1e-5),
        out_shape=jax.ShapeDtypeStruct((B, out_p), x.dtype),  # no batch padding in HBM
        grid_spec=pltpu.PrefetchScalarGridSpec(
            num_scalar_prefetch=0,
            grid=grid,
            in_specs=in_specs,
            out_specs=pl.BlockSpec((bb, out_p), lambda i: (i, 0)),
        ),
        compiler_params=pltpu.CompilerParams(
            dimension_semantics=("parallel",),  # independent batch tiles -> megacore sharding
            vmem_limit_bytes=vmem_limit,
        ),
    )(*kernel_args)

    out = out_padded[:, :out_dim]
    return out.reshape(orig_shape[:-1] + (out_dim,))


def _reference(x, gamma, beta, weights, biases):
    xf = x.astype(jnp.float32)
    mean = jnp.mean(xf, axis=-1, keepdims=True)
    var = jnp.mean((xf - mean) ** 2, axis=-1, keepdims=True)
    h = (xf - mean) * lax.rsqrt(var + 1e-5) * gamma + beta
    for i, (w, b) in enumerate(zip(weights, biases)):
        h = h @ w + b
        if i + 1 < len(weights):
            h = jnp.maximum(h, 0.0)
    return h.astype(x.dtype)


if __name__ == "__main__":
    # Small shapes consistent with MLP(in_dim=32, mlp_dim=64, out_dim=10, num_layers=3).
    # B=200 exercises >=2 batch tiles plus a partial (bounds-handled) last tile.
    B, in_dim, mlp_dim, out_dim = 200, 32, 64, 10

    key = jax.random.PRNGKey(0)
    kx, k1, k2, k3, kb1, kb2, kb3 = jax.random.split(key, 7)

    x = jax.random.normal(kx, (B, in_dim), dtype=jnp.float32)

    # LayerNorm params (PyTorch default init: weight=1, bias=0).
    gamma = jnp.ones((in_dim,), jnp.float32)
    beta = jnp.zeros((in_dim,), jnp.float32)

    def lin_init(kw, kb, fan_in, fan_out):
        bound = 1.0 / (fan_in ** 0.5)
        w = jax.random.uniform(kw, (fan_in, fan_out), jnp.float32, -bound, bound)
        b = jax.random.uniform(kb, (fan_out,), jnp.float32, -bound, bound)
        return w, b

    w1, b1 = lin_init(k1, kb1, in_dim, mlp_dim)
    w2, b2 = lin_init(k2, kb2, mlp_dim, mlp_dim)
    w3, b3 = lin_init(k3, kb3, mlp_dim, out_dim)
    weights, biases = (w1, w2, w3), (b1, b2, b3)

    ref = _reference(x, gamma, beta, weights, biases)

    # Exactness check of the fused LayerNorm + padding path with f32 matmuls.
    gp, bp, wps, bps = prepare_params(gamma, beta, weights, biases, matmul_dtype=jnp.float32)
    out_f32 = jax.block_until_ready(mlp_forward(x, gp, bp, wps, bps, out_dim=out_dim))
    assert out_f32.shape == (B, out_dim)
    assert jnp.allclose(out_f32, ref, atol=1e-4, rtol=1e-4), "f32 kernel mismatch vs reference"

    # Default (performance) path: bf16 matmul inputs, f32 accumulation -> looser tolerance.
    gp, bp, wps, bps = prepare_params(gamma, beta, weights, biases)  # bf16, prepared once
    out_bf16 = jax.block_until_ready(mlp_forward(x, gp, bp, wps, bps, out_dim=out_dim))
    assert out_bf16.shape == (B, out_dim)
    assert jnp.allclose(out_bf16, ref, atol=2e-2, rtol=2e-2), "bf16 kernel mismatch vs reference"

    print("KERNEL_OK")
</pallas_src>

<mosaic_0001>
module attributes {stable_mosaic.version = 11 : i64} {
  func.func @_mlp_kernel(%arg0: i32, %arg1: memref<104x32xf32, #tpu.memory_space<vmem>>, %arg2: memref<1x32xf32, #tpu.memory_space<vmem>>, %arg3: memref<1x32xf32, #tpu.memory_space<vmem>>, %arg4: memref<32x128xf32, #tpu.memory_space<vmem>>, %arg5: memref<1x128xf32, #tpu.memory_space<vmem>>, %arg6: memref<128x128xf32, #tpu.memory_space<vmem>>, %arg7: memref<1x128xf32, #tpu.memory_space<vmem>>, %arg8: memref<128x128xf32, #tpu.memory_space<vmem>>, %arg9: memref<1x128xf32, #tpu.memory_space<vmem>>, %arg10: memref<104x128xf32, #tpu.memory_space<vmem>>) attributes {dimension_semantics = [#tpu.dimension_semantics<parallel>], iteration_bounds = array<i64: 2>, scalar_prefetch = 0 : i64, scratch_operands = 0 : i64, tpu.core_type = #tpu.core_type<tc>, window_params = [{transform_indices = @transform_0, window_bounds = array<i64: 104, 32>}, {pipeline_mode = #tpu.pipeline_mode<synchronous>, transform_indices = @transform_1, window_bounds = array<i64: 1, 32>}, {pipeline_mode = #tpu.pipeline_mode<synchronous>, transform_indices = @transform_2, window_bounds = array<i64: 1, 32>}, {pipeline_mode = #tpu.pipeline_mode<synchronous>, transform_indices = @transform_3, window_bounds = array<i64: 32, 128>}, {pipeline_mode = #tpu.pipeline_mode<synchronous>, transform_indices = @transform_4, window_bounds = array<i64: 1, 128>}, {pipeline_mode = #tpu.pipeline_mode<synchronous>, transform_indices = @transform_5, window_bounds = array<i64: 128, 128>}, {pipeline_mode = #tpu.pipeline_mode<synchronous>, transform_indices = @transform_6, window_bounds = array<i64: 1, 128>}, {pipeline_mode = #tpu.pipeline_mode<synchronous>, transform_indices = @transform_7, window_bounds = array<i64: 128, 128>}, {pipeline_mode = #tpu.pipeline_mode<synchronous>, transform_indices = @transform_8, window_bounds = array<i64: 1, 128>}, {transform_indices = @transform_9, window_bounds = array<i64: 104, 128>}]} {
    %c0 = arith.constant 0 : index
    %c0_0 = arith.constant 0 : index
    %0 = vector.load %arg2[%c0, %c0_0] : memref<1x32xf32, #tpu.memory_space<vmem>>, vector<1x32xf32>
    %c0_1 = arith.constant 0 : index
    %c0_2 = arith.constant 0 : index
    %1 = vector.load %arg3[%c0_1, %c0_2] : memref<1x32xf32, #tpu.memory_space<vmem>>, vector<1x32xf32>
    %c0_3 = arith.constant 0 : index
    %c0_4 = arith.constant 0 : index
    %2 = vector.load %arg1[%c0_3, %c0_4] : memref<104x32xf32, #tpu.memory_space<vmem>>, vector<104x32xf32>
    %cst = arith.constant dense<0.000000e+00> : vector<104xf32>
    %3 = vector.multi_reduction <add>, %2, %cst [1] : vector<104x32xf32> to vector<104xf32>
    %4 = vector.shape_cast %3 : vector<104xf32> to vector<104x1xf32>
    %cst_5 = arith.constant 3.200000e+01 : f32
    %5 = vector.broadcast %cst_5 : f32 to vector<104x1xf32>
    %6 = arith.divf %4, %5 : vector<104x1xf32>
    %7 = vector.broadcast %6 : vector<104x1xf32> to vector<104x32xf32>
    %8 = arith.subf %2, %7 : vector<104x32xf32>
    %9 = arith.mulf %8, %8 : vector<104x32xf32>
    %cst_6 = arith.constant dense<0.000000e+00> : vector<104xf32>
    %10 = vector.multi_reduction <add>, %9, %cst_6 [1] : vector<104x32xf32> to vector<104xf32>
    %11 = vector.shape_cast %10 : vector<104xf32> to vector<104x1xf32>
    %cst_7 = arith.constant 3.200000e+01 : f32
    %12 = vector.broadcast %cst_7 : f32 to vector<104x1xf32>
    %13 = arith.divf %11, %12 : vector<104x1xf32>
    %14 = vector.broadcast %6 : vector<104x1xf32> to vector<104x32xf32>
    %15 = arith.subf %2, %14 : vector<104x32xf32>
    %cst_8 = arith.constant 0.000000e+00 : f32
    %16 = vector.broadcast %cst_8 : f32 to vector<104x1xf32>
    %17 = arith.maximumf %13, %16 : vector<104x1xf32>
    %cst_9 = arith.constant 9.99999974E-6 : f32
    %18 = vector.broadcast %cst_9 : f32 to vector<104x1xf32>
    %19 = arith.addf %17, %18 : vector<104x1xf32>
    %20 = math.rsqrt %19 : vector<104x1xf32>
    %21 = vector.broadcast %20 : vector<104x1xf32> to vector<104x32xf32>
    %22 = arith.mulf %15, %21 : vector<104x32xf32>
    %23 = vector.broadcast %0 : vector<1x32xf32> to vector<104x32xf32>
    %24 = arith.mulf %22, %23 : vector<104x32xf32>
    %25 = vector.broadcast %1 : vector<1x32xf32> to vector<104x32xf32>
    %26 = arith.addf %24, %25 : vector<104x32xf32>
    %c0_10 = arith.constant 0 : index
    %c0_11 = arith.constant 0 : index
    %27 = vector.load %arg4[%c0_10, %c0_11] : memref<32x128xf32, #tpu.memory_space<vmem>>, vector<32x128xf32>
    %cst_12 = arith.constant dense<0.000000e+00> : vector<104x128xf32>
    %28 = tpu.matmul %26, %27, %cst_12 {dimension_numbers = #tpu.dot_dimension_numbers<[1], [0], [0], [1], [0, 0, 1, 1], [], []>} : vector<104x32xf32>, vector<32x128xf32>, vector<104x128xf32> -> vector<104x128xf32>
    %c0_13 = arith.constant 0 : index
    %c0_14 = arith.constant 0 : index
    %29 = vector.load %arg5[%c0_13, %c0_14] : memref<1x128xf32, #tpu.memory_space<vmem>>, vector<1x128xf32>
    %30 = vector.broadcast %29 : vector<1x128xf32> to vector<104x128xf32>
    %31 = arith.addf %28, %30 : vector<104x128xf32>
    %cst_15 = arith.constant 0.000000e+00 : f32
    %32 = vector.broadcast %cst_15 : f32 to vector<104x128xf32>
    %33 = arith.maximumf %31, %32 : vector<104x128xf32>
    %c0_16 = arith.constant 0 : index
    %c0_17 = arith.constant 0 : index
    %34 = vector.load %arg6[%c0_16, %c0_17] : memref<128x128xf32, #tpu.memory_space<vmem>>, vector<128x128xf32>
    %cst_18 = arith.constant dense<0.000000e+00> : vector<104x128xf32>
    %35 = tpu.matmul %33, %34, %cst_18 {dimension_numbers = #tpu.dot_dimension_numbers<[1], [0], [0], [1], [0, 0, 1, 1], [], []>} : vector<104x128xf32>, vector<128x128xf32>, vector<104x128xf32> -> vector<104x128xf32>
    %c0_19 = arith.constant 0 : index
    %c0_20 = arith.constant 0 : index
    %36 = vector.load %arg7[%c0_19, %c0_20] : memref<1x128xf32, #tpu.memory_space<vmem>>, vector<1x128xf32>
    %37 = vector.broadcast %36 : vector<1x128xf32> to vector<104x128xf32>
    %38 = arith.addf %35, %37 : vector<104x128xf32>
    %cst_21 = arith.constant 0.000000e+00 : f32
    %39 = vector.broadcast %cst_21 : f32 to vector<104x128xf32>
    %40 = arith.maximumf %38, %39 : vector<104x128xf32>
    %c0_22 = arith.constant 0 : index
    %c0_23 = arith.constant 0 : index
    %41 = vector.load %arg8[%c0_22, %c0_23] : memref<128x128xf32, #tpu.memory_space<vmem>>, vector<128x128xf32>
    %cst_24 = arith.constant dense<0.000000e+00> : vector<104x128xf32>
    %42 = tpu.matmul %40, %41, %cst_24 {dimension_numbers = #tpu.dot_dimension_numbers<[1], [0], [0], [1], [0, 0, 1, 1], [], []>} : vector<104x128xf32>, vector<128x128xf32>, vector<104x128xf32> -> vector<104x128xf32>
    %c0_25 = arith.constant 0 : index
    %c0_26 = arith.constant 0 : index
    %43 = vector.load %arg9[%c0_25, %c0_26] : memref<1x128xf32, #tpu.memory_space<vmem>>, vector<1x128xf32>
    %44 = vector.broadcast %43 : vector<1x128xf32> to vector<104x128xf32>
    %45 = arith.addf %42, %44 : vector<104x128xf32>
    %c0_27 = arith.constant 0 : index
    %c0_28 = arith.constant 0 : index
    %46 = vector.load %arg10[%c0_27, %c0_28] : memref<104x128xf32, #tpu.memory_space<vmem>>, vector<104x128xf32>
    tpu.vector_store %arg10[%c0_27, %c0_28], %45 {strides = array<i32>} : memref<104x128xf32, #tpu.memory_space<vmem>>, vector<104x128xf32>,
    return
  }
  func.func @transform_0(%arg0: i32) -> (i32, i32) {
    %c0_i32 = arith.constant 0 : i32
    %c0_i32_0 = arith.constant 0 : i32
    return %arg0, %c0_i32 : i32, i32
  }
  func.func @transform_1(%arg0: i32) -> (i32, i32) {
    %c0_i32 = arith.constant 0 : i32
    %c0_i32_0 = arith.constant 0 : i32
    %c0_i32_1 = arith.constant 0 : i32
    return %c0_i32, %c0_i32_0 : i32, i32
  }
  func.func @transform_2(%arg0: i32) -> (i32, i32) {
    %c0_i32 = arith.constant 0 : i32
    %c0_i32_0 = arith.constant 0 : i32
    %c0_i32_1 = arith.constant 0 : i32
    return %c0_i32, %c0_i32_0 : i32, i32
  }
  func.func @transform_3(%arg0: i32) -> (i32, i32) {
    %c0_i32 = arith.constant 0 : i32
    %c0_i32_0 = arith.constant 0 : i32
    %c0_i32_1 = arith.constant 0 : i32
    return %c0_i32, %c0_i32_0 : i32, i32
  }
  func.func @transform_4(%arg0: i32) -> (i32, i32) {
    %c0_i32 = arith.constant 0 : i32
    %c0_i32_0 = arith.constant 0 : i32
    %c0_i32_1 = arith.constant 0 : i32
    return %c0_i32, %c0_i32_0 : i32, i32
  }
  func.func @transform_5(%arg0: i32) -> (i32, i32) {
    %c0_i32 = arith.constant 0 : i32
    %c0_i32_0 = arith.constant 0 : i32
    %c0_i32_1 = arith.constant 0 : i32
    return %c0_i32, %c0_i32_0 : i32, i32
  }
  func.func @transform_6(%arg0: i32) -> (i32, i32) {
    %c0_i32 = arith.constant 0 : i32
    %c0_i32_0 = arith.constant 0 : i32
    %c0_i32_1 = arith.constant 0 : i32
    return %c0_i32, %c0_i32_0 : i32, i32
  }
  func.func @transform_7(%arg0: i32) -> (i32, i32) {
    %c0_i32 = arith.constant 0 : i32
    %c0_i32_0 = arith.constant 0 : i32
    %c0_i32_1 = arith.constant 0 : i32
    return %c0_i32, %c0_i32_0 : i32, i32
  }
  func.func @transform_8(%arg0: i32) -> (i32, i32) {
    %c0_i32 = arith.constant 0 : i32
    %c0_i32_0 = arith.constant 0 : i32
    %c0_i32_1 = arith.constant 0 : i32
    return %c0_i32, %c0_i32_0 : i32, i32
  }
  func.func @transform_9(%arg0: i32) -> (i32, i32) {
    %c0_i32 = arith.constant 0 : i32
    %c0_i32_0 = arith.constant 0 : i32
    return %arg0, %c0_i32 : i32, i32
  }
}

</mosaic_0001>

<llo_original>
// kernel: mlp_forward.1
$region0: #{mlp_forward.1}
  #allocation0 [shape = 'u32[]', space=smem, size = 0x4, offset = 0x4, fixed_abs, tag = 'smem constant byte address 0x4 - core index']
  #allocation1 [shape = 'u32[144,128]{1,0:T(1,128)}', space=vmem, size = 0x12000, scoped, tag = 'internal scratch']
  %s0 = inlined_call_operand.vmem [shape: f32[200,32], index: 0, kind: input, shape index: {}]
  %s1 = inlined_call_operand.vmem [shape: f32[1,32], index: 1, kind: input, shape index: {}]
  %s2 = inlined_call_operand.vmem [shape: f32[1,32], index: 2, kind: input, shape index: {}]
  %s3 = inlined_call_operand.hbm [shape: f32[32,128], index: 3, kind: input, shape index: {}]
  %s4 = inlined_call_operand.vmem [shape: f32[1,128], index: 4, kind: input, shape index: {}]
  %s5 = inlined_call_operand.vmem [shape: f32[128,128], index: 5, kind: input, shape index: {}]
  %s6 = inlined_call_operand.vmem [shape: f32[1,128], index: 6, kind: input, shape index: {}]
  %s7 = inlined_call_operand.vmem [shape: f32[128,128], index: 7, kind: input, shape index: {}]
  %s8 = inlined_call_operand.vmem [shape: f32[1,128], index: 8, kind: input, shape index: {}]
  %s9 = inlined_call_operand.vmem [shape: f32[200,128], index: 9, kind: output, shape index: {}]
  %s10 = sld [smem:[#allocation0]]
  $region121: #{mlp_forward.1} parent=0
    _
  %s12 = ssub.s32 1, %s10
  %s13 = scalar_select 0, %s12, %s10
  $region1: #{mlp_forward.1} parent=0
    #allocation2 [shape = 'u8[16384]{0}', space=vmem, size = 0x4000, scoped, tag = 'input window, operand 3, single buffered']
    #allocation3 [shape = 's32[2]{0}', space=sflag, size = 0x8, scoped, tag = 'scoped memory for mlp_forward.1']
    #allocation4 [shape = 'u8[106496]{0}', space=vmem, size = 0x1a000, scoped, tag = 'output window, operand 0']
    %14 = vsyncpa [#allocation3], 0
    loop: start=0, step=1, limit=4
    $region2: #{mlp_forward.1} parent=1 // loop_pre_header
      _
    $region3: #{mlp_forward.1} parent=1 // loop_header
      %s16 = sphi 0, %s20
      %p17 = scmp.ge.s32.totalorder %s16, 4
      %s26 = sphi 0, %s28
      %s29 = sphi 0, %s26
      %s30 = sphi 0, %s29
      %s46 = sphi 0, %s30
      %s50 = sphi 0, %s50
      %s52 = sphi 0, %s50
      %s53 = sphi 0, %s52
      %s67 = sphi 0, %s53
      %s71 = sphi 0, %s71
      %s73 = sphi 0, %s71
      %s74 = sphi 0, %s73
      %s88 = sphi 0, %s74
      %s92 = sphi 0, %s92
      %s94 = sphi 0, %s92
      %s95 = sphi 0, %s94
      %s109 = sphi 0, %s95
      %s113 = sphi 0, %s113
      %s115 = sphi 0, %s113
      %s116 = sphi 0, %s115
      %s130 = sphi 0, %s116
      %s134 = sphi 0, %s134
      %s136 = sphi 0, %s134
      %s137 = sphi 0, %s136
      %s151 = sphi 0, %s137
      %s155 = sphi 0, %s155
      %s157 = sphi 0, %s155
      %s158 = sphi 0, %s157
      %s172 = sphi 0, %s158
      %s176 = sphi 0, %s176
      %s178 = sphi 0, %s176
      %s179 = sphi 0, %s178
      %s193 = sphi 0, %s179
      %s197 = sphi 0, %s197
      %s199 = sphi 0, %s197
      %s200 = sphi 0, %s199
      %s214 = sphi 0, %s200
      %s220 = sphi 0, %s222
      %s223 = sphi 0, %s220
      %s224 = sphi 0, %s223
      %s240 = sphi 0, %s224
    $region4: #{mlp_forward.1} parent=1 // loop_header_branch
      %19 = sbr.rel (%p17) target = $region8
    $region5: #{mlp_forward.1} parent=1 // loop_body
      %s21 = ssub.s32 %s16, 1
      %s22 = ssub.s32 %s16, 2
      %s23 = sadd.s32 %s16, 1
      %s24 = ssub.s32 %s16, %s23
      %p25 = scmp.eq.s32.totalorder %s24, 0
      %s27 = sadd.s32 %s26, 1
      %s28 = scalar_select %p25, %s26, %s27
      %p31 = pneg %p25
      %p32 = scmp.eq.s32.totalorder %s16, 1
      %p33 = por %p31, %p32
      %p34 = scmp.ne.s32.totalorder %s26, %s29
      %p35 = scmp.eq.s32.totalorder %s16, 0
      %p36 = por %p34, %p35
      %p37 = scmp.ne.s32.totalorder %s26, %s29
      %p38 = scmp.eq.s32.totalorder %s21, 1
      %p39 = por %p37, %p38
      %p40 = scmp.ne.s32.totalorder %s29, %s30
      %p41 = scmp.eq.s32.totalorder %s21, 0
      %p42 = por %p40, %p41
      %p43 = scmp.ne.s32.totalorder %s29, %s30
      %p44 = scmp.eq.s32.totalorder %s22, 1
      %p45 = por %p43, %p44
      %p47 = scmp.ne.s32.totalorder %s30, %s46
      %p48 = scmp.eq.s32.totalorder %s22, 0
      %p49 = por %p47, %p48
      %s51 = sadd.s32 %s50, 1
      %p54 = scmp.eq.s32.totalorder %s16, 1
      %p55 = scmp.ne.s32.totalorder %s50, %s52
      %p56 = scmp.eq.s32.totalorder %s16, 0
      %p57 = por %p55, %p56
      %p58 = scmp.ne.s32.totalorder %s50, %s52
      %p59 = scmp.eq.s32.totalorder %s21, 1
      %p60 = por %p58, %p59
      %p61 = scmp.ne.s32.totalorder %s52, %s53
      %p62 = scmp.eq.s32.totalorder %s21, 0
      %p63 = por %p61, %p62
      %p64 = scmp.ne.s32.totalorder %s52, %s53
      %p65 = scmp.eq.s32.totalorder %s22, 1
      %p66 = por %p64, %p65
      %p68 = scmp.ne.s32.totalorder %s53, %s67
      %p69 = scmp.eq.s32.totalorder %s22, 0
      %p70 = por %p68, %p69
      %s72 = sadd.s32 %s71, 1
      %p75 = scmp.eq.s32.totalorder %s16, 1
      %p76 = scmp.ne.s32.totalorder %s71, %s73
      %p77 = scmp.eq.s32.totalorder %s16, 0
      %p78 = por %p76, %p77
      %p79 = scmp.ne.s32.totalorder %s71, %s73
      %p80 = scmp.eq.s32.totalorder %s21, 1
      %p81 = por %p79, %p80
      %p82 = scmp.ne.s32.totalorder %s73, %s74
      %p83 = scmp.eq.s32.totalorder %s21, 0
      %p84 = por %p82, %p83
      %p85 = scmp.ne.s32.totalorder %s73, %s74
      %p86 = scmp.eq.s32.totalorder %s22, 1
      %p87 = por %p85, %p86
      %p89 = scmp.ne.s32.totalorder %s74, %s88
      %p90 = scmp.eq.s32.totalorder %s22, 0
      %p91 = por %p89, %p90
      %s93 = sadd.s32 %s92, 1
      %p96 = scmp.eq.s32.totalorder %s16, 1
      %p97 = scmp.ne.s32.totalorder %s92, %s94
      %p98 = scmp.eq.s32.totalorder %s16, 0
      %p99 = por %p97, %p98
      %p100 = scmp.ne.s32.totalorder %s92, %s94
      %p101 = scmp.eq.s32.totalorder %s21, 1
      %p102 = por %p100, %p101
      %p103 = scmp.ne.s32.totalorder %s94, %s95
      %p104 = scmp.eq.s32.totalorder %s21, 0
      %p105 = por %p103, %p104
      %p106 = scmp.ne.s32.totalorder %s94, %s95
      %p107 = scmp.eq.s32.totalorder %s22, 1
      %p108 = por %p106, %p107
      %p110 = scmp.ne.s32.totalorder %s95, %s109
      %p111 = scmp.eq.s32.totalorder %s22, 0
      %p112 = por %p110, %p111
      %s114 = sadd.s32 %s113, 1
      %p117 = scmp.eq.s32.totalorder %s16, 1
      %p118 = scmp.ne.s32.totalorder %s113, %s115
      %p119 = scmp.eq.s32.totalorder %s16, 0
      %p120 = por %p118, %p119
      %p121 = scmp.ne.s32.totalorder %s113, %s115
      %p122 = scmp.eq.s32.totalorder %s21, 1
      %p123 = por %p121, %p122
      %p124 = scmp.ne.s32.totalorder %s115, %s116
      %p125 = scmp.eq.s32.totalorder %s21, 0
      %p126 = por %p124, %p125
      %p127 = scmp.ne.s32.totalorder %s115, %s116
      %p128 = scmp.eq.s32.totalorder %s22, 1
      %p129 = por %p127, %p128
      %p131 = scmp.ne.s32.totalorder %s116, %s130
      %p132 = scmp.eq.s32.totalorder %s22, 0
      %p133 = por %p131, %p132
      %s135 = sadd.s32 %s134, 1
      %p138 = scmp.eq.s32.totalorder %s16, 1
      %p139 = scmp.ne.s32.totalorder %s134, %s136
      %p140 = scmp.eq.s32.totalorder %s16, 0
      %p141 = por %p139, %p140
      %p142 = scmp.ne.s32.totalorder %s134, %s136
      %p143 = scmp.eq.s32.totalorder %s21, 1
      %p144 = por %p142, %p143
      %p145 = scmp.ne.s32.totalorder %s136, %s137
      %p146 = scmp.eq.s32.totalorder %s21, 0
      %p147 = por %p145, %p146
      %p148 = scmp.ne.s32.totalorder %s136, %s137
      %p149 = scmp.eq.s32.totalorder %s22, 1
      %p150 = por %p148, %p149
      %p152 = scmp.ne.s32.totalorder %s137, %s151
      %p153 = scmp.eq.s32.totalorder %s22, 0
      %p154 = por %p152, %p153
      %s156 = sadd.s32 %s155, 1
      %p159 = scmp.eq.s32.totalorder %s16, 1
      %p160 = scmp.ne.s32.totalorder %s155, %s157
      %p161 = scmp.eq.s32.totalorder %s16, 0
      %p162 = por %p160, %p161
      %p163 = scmp.ne.s32.totalorder %s155, %s157
      %p164 = scmp.eq.s32.totalorder %s21, 1
      %p165 = por %p163, %p164
      %p166 = scmp.ne.s32.totalorder %s157, %s158
      %p167 = scmp.eq.s32.totalorder %s21, 0
      %p168 = por %p166, %p167
      %p169 = scmp.ne.s32.totalorder %s157, %s158
      %p170 = scmp.eq.s32.totalorder %s22, 1
      %p171 = por %p169, %p170
      %p173 = scmp.ne.s32.totalorder %s158, %s172
      %p174 = scmp.eq.s32.totalorder %s22, 0
      %p175 = por %p173, %p174
      %s177 = sadd.s32 %s176, 1
      %p180 = scmp.eq.s32.totalorder %s16, 1
      %p181 = scmp.ne.s32.totalorder %s176, %s178
      %p182 = scmp.eq.s32.totalorder %s16, 0
      %p183 = por %p181, %p182
      %p184 = scmp.ne.s32.totalorder %s176, %s178
      %p185 = scmp.eq.s32.totalorder %s21, 1
      %p186 = por %p184, %p185
      %p187 = scmp.ne.s32.totalorder %s178, %s179
      %p188 = scmp.eq.s32.totalorder %s21, 0
      %p189 = por %p187, %p188
      %p190 = scmp.ne.s32.totalorder %s178, %s179
      %p191 = scmp.eq.s32.totalorder %s22, 1
      %p192 = por %p190, %p191
      %p194 = scmp.ne.s32.totalorder %s179, %s193
      %p195 = scmp.eq.s32.totalorder %s22, 0
      %p196 = por %p194, %p195
      %s198 = sadd.s32 %s197, 1
      %p201 = scmp.eq.s32.totalorder %s16, 1
      %p202 = scmp.ne.s32.totalorder %s197, %s199
      %p203 = scmp.eq.s32.totalorder %s16, 0
      %p204 = por %p202, %p203
      %p205 = scmp.ne.s32.totalorder %s197, %s199
      %p206 = scmp.eq.s32.totalorder %s21, 1
      %p207 = por %p205, %p206
      %p208 = scmp.ne.s32.totalorder %s199, %s200
      %p209 = scmp.eq.s32.totalorder %s21, 0
      %p210 = por %p208, %p209
      %p211 = scmp.ne.s32.totalorder %s199, %s200
      %p212 = scmp.eq.s32.totalorder %s22, 1
      %p213 = por %p211, %p212
      %p215 = scmp.ne.s32.totalorder %s200, %s214
      %p216 = scmp.eq.s32.totalorder %s22, 0
      %p217 = por %p215, %p216
      %s218 = ssub.s32 %s16, %s23
      %p219 = scmp.eq.s32.totalorder %s218, 0
      %s221 = sadd.s32 %s220, 1
      %s222 = scalar_select %p219, %s220, %s221
      %p225 = pneg %p219
      %p226 = scmp.eq.s32.totalorder %s16, 1
      %p227 = por %p225, %p226
      %p228 = scmp.ne.s32.totalorder %s220, %s223
      %p229 = scmp.eq.s32.totalorder %s16, 0
      %p230 = por %p228, %p229
      %p231 = scmp.ne.s32.totalorder %s220, %s223
      %p232 = scmp.eq.s32.totalorder %s21, 1
      %p233 = por %p231, %p232
      %p234 = scmp.ne.s32.totalorder %s223, %s224
      %p235 = scmp.eq.s32.totalorder %s21, 0
      %p236 = por %p234, %p235
      %p237 = scmp.ne.s32.totalorder %s223, %s224
      %p238 = scmp.eq.s32.totalorder %s22, 1
      %p239 = por %p237, %p238
      %p241 = scmp.ne.s32.totalorder %s224, %s240
      %p242 = scmp.eq.s32.totalorder %s22, 0
      %p243 = por %p241, %p242
      %p244 = scmp.le.s32.totalorder 1, %s16
      %p245 = scmp.lt.s32.totalorder %s16, 3
      %p246 = pnand %p244, %p245
      %p247 = pneg %p246
      // Predicated region
      $region9: #{mlp_forward.1} parent=5 // pred_check
        _
      $region10: #{mlp_forward.1} parent=5 // pred_check_branch
        %249 = sbr.rel (%p246) target = $region12
      $region11: #{mlp_forward.1} parent=5 // pred_region
        %s250 = ssub.s32 %s16, 1
        // Predicated region
        $region13: #{mlp_forward.1} parent=11 // pred_check
          %p251 = pneg %p63
        $region14: #{mlp_forward.1} parent=11 // pred_check_branch
          %253 = sbr.rel (%p251) target = $region16
        $region15: #{mlp_forward.1} parent=11 // pred_region
          _
        $region16: #{mlp_forward.1} parent=11 // pred_fallthru
          _
        // Predicated region
        $region17: #{mlp_forward.1} parent=11 // pred_check
          %p254 = pneg %p84
        $region18: #{mlp_forward.1} parent=11 // pred_check_branch
          %256 = sbr.rel (%p254) target = $region20
        $region19: #{mlp_forward.1} parent=11 // pred_region
          _
        $region20: #{mlp_forward.1} parent=11 // pred_fallthru
          _
        // Predicated region
        $region21: #{mlp_forward.1} parent=11 // pred_check
          %p257 = pneg %p105
        $region22: #{mlp_forward.1} parent=11 // pred_check_branch
          %259 = sbr.rel (%p257) target = $region24
        $region23: #{mlp_forward.1} parent=11 // pred_region
          %s261 = ssub.s32 512, 512
          %262 = vsyncadd [#allocation3], %s261
          %s263 = sshll.u32 [#allocation2], 4
          %s264 = int_to_ptr.vmem [resolvable:$true] %s263
          %269 = dma.hbm_to_vmem [thread:$0]  %s3, 512, %s264, [#allocation3], 128, 128, 8
        $region24: #{mlp_forward.1} parent=11 // pred_fallthru
          _
        // Predicated region
        $region25: #{mlp_forward.1} parent=11 // pred_check
          %p270 = pneg %p126
        $region26: #{mlp_forward.1} parent=11 // pred_check_branch
          %272 = sbr.rel (%p270) target = $region28
        $region27: #{mlp_forward.1} parent=11 // pred_region
          _
        $region28: #{mlp_forward.1} parent=11 // pred_fallthru
          _
        // Predicated region
        $region29: #{mlp_forward.1} parent=11 // pred_check
          %p273 = pneg %p147
        $region30: #{mlp_forward.1} parent=11 // pred_check_branch
          %275 = sbr.rel (%p273) target = $region32
        $region31: #{mlp_forward.1} parent=11 // pred_region
          _
        $region32: #{mlp_forward.1} parent=11 // pred_fallthru
          _
        // Predicated region
        $region33: #{mlp_forward.1} parent=11 // pred_check
          %p276 = pneg %p168
        $region34: #{mlp_forward.1} parent=11 // pred_check_branch
          %278 = sbr.rel (%p276) target = $region36
        $region35: #{mlp_forward.1} parent=11 // pred_region
          _
        $region36: #{mlp_forward.1} parent=11 // pred_fallthru
          _
        // Predicated region
        $region37: #{mlp_forward.1} parent=11 // pred_check
          %p279 = pneg %p189
        $region38: #{mlp_forward.1} parent=11 // pred_check_branch
          %281 = sbr.rel (%p279) target = $region40
        $region39: #{mlp_forward.1} parent=11 // pred_region
          _
        $region40: #{mlp_forward.1} parent=11 // pred_fallthru
          _
        // Predicated region
        $region41: #{mlp_forward.1} parent=11 // pred_check
          %p282 = pneg %p210
        $region42: #{mlp_forward.1} parent=11 // pred_check_branch
          %284 = sbr.rel (%p282) target = $region44
        $region43: #{mlp_forward.1} parent=11 // pred_region
          _
        $region44: #{mlp_forward.1} parent=11 // pred_fallthru
          _
      $region12: #{mlp_forward.1} parent=5 // pred_fallthru
        _
      %p285 = scmp.lt.s32.totalorder %s16, 2
      // Predicated region
      $region45: #{mlp_forward.1} parent=5 // pred_check
        %p286 = pneg %p285
      $region46: #{mlp_forward.1} parent=5 // pred_check_branch
        %288 = sbr.rel (%p286) target = $region48
      $region47: #{mlp_forward.1} parent=5 // pred_region
        // Predicated region
        $region49: #{mlp_forward.1} parent=47 // pred_check
          %p289 = pneg %p36
        $region50: #{mlp_forward.1} parent=47 // pred_check_branch
          %291 = sbr.rel (%p289) target = $region52
        $region51: #{mlp_forward.1} parent=47 // pred_region
          %s292 = smul.u32 13, %s16
          %s293 = ssub.s32 25, %s292
          %p294 = scmp.lt.s32.totalorder %s293, 13
          %s295 = scalar_select %p294, %s293, 13
          %s296 = smul.u32 128, %s295
          %p297 = scmp.lt.s32.totalorder %s292, 24
          %s298 = scalar_select %p297, %s292, 24
          %s299 = smul.addr %s298, 8
          %s300 = scalar_lea.vmem %s0, %s299
          %s301 = smul.u32 13, %s16
          %s302 = ssub.s32 25, %s301
          %p303 = scmp.lt.s32.totalorder %s302, 13
          %s304 = scalar_select %p303, %s302, 13
          %s305 = smul.u32 128, %s304
        $region52: #{mlp_forward.1} parent=47 // pred_fallthru
          _
      $region48: #{mlp_forward.1} parent=5 // pred_fallthru
        _
      %p306 = scmp.le.s32.totalorder 1, %s16
      %p307 = scmp.lt.s32.totalorder %s16, 3
      %p308 = pnand %p306, %p307
      %p309 = pneg %p308
      // Predicated region
      $region53: #{mlp_forward.1} parent=5 // pred_check
        _
      $region54: #{mlp_forward.1} parent=5 // pred_check_branch
        %311 = sbr.rel (%p308) target = $region56
      $region55: #{mlp_forward.1} parent=5 // pred_region
        %s312 = ssub.s32 %s16, 1
        // Predicated region
        $region57: #{mlp_forward.1} parent=55 // pred_check
          %p313 = pneg %p105
        $region58: #{mlp_forward.1} parent=55 // pred_check_branch
          %315 = sbr.rel (%p313) target = $region60
        $region59: #{mlp_forward.1} parent=55 // pred_region
          %316 = dma.done [#allocation3], 512
        $region60: #{mlp_forward.1} parent=55 // pred_fallthru
          _
        %s317 = smul.u32 13, %s21
        %s318 = ssub.s32 25, %s317
        %p319 = scmp.lt.s32.totalorder %s318, 13
        %s320 = scalar_select %p319, %s318, 13
        %s321 = smul.u32 128, %s320
        %p322 = scmp.lt.s32.totalorder %s317, 24
        %s323 = scalar_select %p322, %s317, 24
        %s324 = smul.addr %s323, 8
        %s325 = scalar_lea.vmem %s0, %s324
        %p326 = pneg %p42
        %p327 = pneg %p39
        %p328 = pneg %p63
        %p329 = pneg %p60
        %p330 = pneg %p84
        %p331 = pneg %p81
        %p332 = pneg %p105
        %p333 = pneg %p102
        %p334 = pneg %p126
        %p335 = pneg %p123
        %p336 = pneg %p147
        %p337 = pneg %p144
        %p338 = pneg %p168
        %p339 = pneg %p165
        %p340 = pneg %p189
        %p341 = pneg %p186
        %p342 = pneg %p210
        %p343 = pneg %p207
        %p344 = pneg %p236
        %p345 = pneg %p233
        %s346 = sand.u32 %s223, 1
        %s347 = sand.u32 %s223, 1
        %s348 = smul.addr %s347, 104
        %s349 = scalar_lea.vmem [#allocation4], %s348
        %s350 = smul.u32 13, %s21
        %s351 = ssub.s32 25, %s350
        %p352 = scmp.lt.s32.totalorder %s351, 13
        %s353 = scalar_select %p352, %s351, 13
        %s354 = smul.u32 128, %s353
        %p355 = scmp.lt.s32.totalorder %s350, 24
        %s356 = scalar_select %p355, %s350, 24
        %s357 = smul.addr %s356, 8
        %s358 = scalar_lea.vmem %s0, %s357
        %s359 = smul.u32 13, %s21
        %s360 = ssub.s32 25, %s359
        %p361 = scmp.lt.s32.totalorder %s360, 13
        %s362 = scalar_select %p361, %s360, 13
        %s363 = smul.u32 128, %s362
        %s364 = smul.u32 13, %s21
        %s365 = ssub.s32 25, %s364
        %p366 = scmp.lt.s32.totalorder %s365, 13
        %s367 = scalar_select %p366, %s365, 13
        %s368 = smul.u32 128, %s367
        %v369 = vld [vmem:[%s1] sm:$0x1]
        %v370 = vld [vmem:[%s2] sm:$0x1]
        %v371 = vld [vmem:[%s358] sm:$0xff]
        %v372 = vld [vmem:[%s358 + $0x8] sm:$0xff]
        %v373 = vld [vmem:[%s358 + $0x10] sm:$0xff]
        %v374 = vld [vmem:[%s358 + $0x18] sm:$0xff]
        %v375 = vld [vmem:[%s358 + $0x20] sm:$0xff]
        %v376 = vld [vmem:[%s358 + $0x28] sm:$0xff]
        %v377 = vld [vmem:[%s358 + $0x30] sm:$0xff]
        %v378 = vld [vmem:[%s358 + $0x38] sm:$0xff]
        %v379 = vld [vmem:[%s358 + $0x40] sm:$0xff]
        %v380 = vld [vmem:[%s358 + $0x48] sm:$0xff]
        %v381 = vld [vmem:[%s358 + $0x50] sm:$0xff]
        %v382 = vld [vmem:[%s358 + $0x58] sm:$0xff]
        %v383 = vld [vmem:[%s358 + $0x60] sm:$0xff]
        %vm384 = vcmask 261120
        %v385 = vsel %vm384, %v371, 0.0
        %386 = vadd.xlane.f32.xlu0 %v385
        %v387 = vpop.xlane.xlu0 %386
        %v388 = vsel %vm384, %v372, 0.0
        %389 = vadd.xlane.f32.xlu0 %v388
        %v390 = vpop.xlane.xlu0 %389
        %v391 = vsel %vm384, %v373, 0.0
        %392 = vadd.xlane.f32.xlu0 %v391
        %v393 = vpop.xlane.xlu0 %392
        %v394 = vsel %vm384, %v374, 0.0
        %395 = vadd.xlane.f32.xlu0 %v394
        %v396 = vpop.xlane.xlu0 %395
        %v397 = vsel %vm384, %v375, 0.0
        %398 = vadd.xlane.f32.xlu0 %v397
        %v399 = vpop.xlane.xlu0 %398
        %v400 = vsel %vm384, %v376, 0.0
        %401 = vadd.xlane.f32.xlu0 %v400
        %v402 = vpop.xlane.xlu0 %401
        %v403 = vsel %vm384, %v377, 0.0
        %404 = vadd.xlane.f32.xlu0 %v403
        %v405 = vpop.xlane.xlu0 %404
        %v406 = vsel %vm384, %v378, 0.0
        %407 = vadd.xlane.f32.xlu0 %v406
        %v408 = vpop.xlane.xlu0 %407
        %v409 = vsel %vm384, %v379, 0.0
        %410 = vadd.xlane.f32.xlu0 %v409
        %v411 = vpop.xlane.xlu0 %410
        %v412 = vsel %vm384, %v380, 0.0
        %413 = vadd.xlane.f32.xlu0 %v412
        %v414 = vpop.xlane.xlu0 %413
        %v415 = vsel %vm384, %v381, 0.0
        %416 = vadd.xlane.f32.xlu0 %v415
        %v417 = vpop.xlane.xlu0 %416
        %v418 = vsel %vm384, %v382, 0.0
        %419 = vadd.xlane.f32.xlu0 %v418
        %v420 = vpop.xlane.xlu0 %419
        %v421 = vsel %vm384, %v383, 0.0
        %422 = vadd.xlane.f32.xlu0 %v421
        %v423 = vpop.xlane.xlu0 %422
        %v424 = vrcp.pop 32.0
        %v425 = vmul.f32 %v387, %v424
        %v426 = vmul.f32 %v390, %v424
        %v427 = vmul.f32 %v393, %v424
        %v428 = vmul.f32 %v396, %v424
        %v429 = vmul.f32 %v399, %v424
        %v430 = vmul.f32 %v402, %v424
        %v431 = vmul.f32 %v405, %v424
        %v432 = vmul.f32 %v408, %v424
        %v433 = vmul.f32 %v411, %v424
        %v434 = vmul.f32 %v414, %v424
        %v435 = vmul.f32 %v417, %v424
        %v436 = vmul.f32 %v420, %v424
        %v437 = vmul.f32 %v423, %v424
        %v438 = vsub.f32 %v371, %v425
        %v439 = vsub.f32 %v372, %v426
        %v440 = vsub.f32 %v373, %v427
        %v441 = vsub.f32 %v374, %v428
        %v442 = vsub.f32 %v375, %v429
        %v443 = vsub.f32 %v376, %v430
        %v444 = vsub.f32 %v377, %v431
        %v445 = vsub.f32 %v378, %v432
        %v446 = vsub.f32 %v379, %v433
        %v447 = vsub.f32 %v380, %v434
        %v448 = vsub.f32 %v381, %v435
        %v449 = vsub.f32 %v382, %v436
        %v450 = vsub.f32 %v383, %v437
        %v451 = vmul.f32 %v438, %v438
        %v452 = vmul.f32 %v439, %v439
        %v453 = vmul.f32 %v440, %v440
        %v454 = vmul.f32 %v441, %v441
        %v455 = vmul.f32 %v442, %v442
        %v456 = vmul.f32 %v443, %v443
        %v457 = vmul.f32 %v444, %v444
        %v458 = vmul.f32 %v445, %v445
        %v459 = vmul.f32 %v446, %v446
        %v460 = vmul.f32 %v447, %v447
        %v461 = vmul.f32 %v448, %v448
        %v462 = vmul.f32 %v449, %v449
        %v463 = vmul.f32 %v450, %v450
        %v464 = vsel %vm384, %v451, 0.0
        %465 = vadd.xlane.f32.xlu0 %v464
        %v466 = vpop.xlane.xlu0 %465
        %v467 = vsel %vm384, %v452, 0.0
        %468 = vadd.xlane.f32.xlu0 %v467
        %v469 = vpop.xlane.xlu0 %468
        %v470 = vsel %vm384, %v453, 0.0
        %471 = vadd.xlane.f32.xlu0 %v470
        %v472 = vpop.xlane.xlu0 %471
        %v473 = vsel %vm384, %v454, 0.0
        %474 = vadd.xlane.f32.xlu0 %v473
        %v475 = vpop.xlane.xlu0 %474
        %v476 = vsel %vm384, %v455, 0.0
        %477 = vadd.xlane.f32.xlu0 %v476
        %v478 = vpop.xlane.xlu0 %477
        %v479 = vsel %vm384, %v456, 0.0
        %480 = vadd.xlane.f32.xlu0 %v479
        %v481 = vpop.xlane.xlu0 %480
        %v482 = vsel %vm384, %v457, 0.0
        %483 = vadd.xlane.f32.xlu0 %v482
        %v484 = vpop.xlane.xlu0 %483
        %v485 = vsel %vm384, %v458, 0.0
        %486 = vadd.xlane.f32.xlu0 %v485
        %v487 = vpop.xlane.xlu0 %486
        %v488 = vsel %vm384, %v459, 0.0
        %489 = vadd.xlane.f32.xlu0 %v488
        %v490 = vpop.xlane.xlu0 %489
        %v491 = vsel %vm384, %v460, 0.0
        %492 = vadd.xlane.f32.xlu0 %v491
        %v493 = vpop.xlane.xlu0 %492
        %v494 = vsel %vm384, %v461, 0.0
        %495 = vadd.xlane.f32.xlu0 %v494
        %v496 = vpop.xlane.xlu0 %495
        %v497 = vsel %vm384, %v462, 0.0
        %498 = vadd.xlane.f32.xlu0 %v497
        %v499 = vpop.xlane.xlu0 %498
        %v500 = vsel %vm384, %v463, 0.0
        %501 = vadd.xlane.f32.xlu0 %v500
        %v502 = vpop.xlane.xlu0 %501
        %v503 = vmul.f32 %v466, %v424
        %v504 = vmul.f32 %v469, %v424
        %v505 = vmul.f32 %v472, %v424
        %v506 = vmul.f32 %v475, %v424
        %v507 = vmul.f32 %v478, %v424
        %v508 = vmul.f32 %v481, %v424
        %v509 = vmul.f32 %v484, %v424
        %v510 = vmul.f32 %v487, %v424
        %v511 = vmul.f32 %v490, %v424
        %v512 = vmul.f32 %v493, %v424
        %v513 = vmul.f32 %v496, %v424
        %v514 = vmul.f32 %v499, %v424
        %v515 = vmul.f32 %v502, %v424
        %v516 = vmax.f32 %v503, 0.0
        %v517 = vmax.f32 %v504, 0.0
        %v518 = vmax.f32 %v505, 0.0
        %v519 = vmax.f32 %v506, 0.0
        %v520 = vmax.f32 %v507, 0.0
        %v521 = vmax.f32 %v508, 0.0
        %v522 = vmax.f32 %v509, 0.0
        %v523 = vmax.f32 %v510, 0.0
        %v524 = vmax.f32 %v511, 0.0
        %v525 = vmax.f32 %v512, 0.0
        %v526 = vmax.f32 %v513, 0.0
        %v527 = vmax.f32 %v514, 0.0
        %v528 = vmax.f32 %v515, 0.0
        %v529 = vadd.f32 %v516, 1e-05
        %v530 = vadd.f32 %v517, 1e-05
        %v531 = vadd.f32 %v518, 1e-05
        %v532 = vadd.f32 %v519, 1e-05
        %v533 = vadd.f32 %v520, 1e-05
        %v534 = vadd.f32 %v521, 1e-05
        %v535 = vadd.f32 %v522, 1e-05
        %v536 = vadd.f32 %v523, 1e-05
        %v537 = vadd.f32 %v524, 1e-05
        %v538 = vadd.f32 %v525, 1e-05
        %v539 = vadd.f32 %v526, 1e-05
        %v540 = vadd.f32 %v527, 1e-05
        %v541 = vadd.f32 %v528, 1e-05
        %v542 = vrsqrt.pop %v529
        %v543 = vrsqrt.pop %v530
        %v544 = vrsqrt.pop %v531
        %v545 = vrsqrt.pop %v532
        %v546 = vrsqrt.pop %v533
        %v547 = vrsqrt.pop %v534
        %v548 = vrsqrt.pop %v535
        %v549 = vrsqrt.pop %v536
        %v550 = vrsqrt.pop %v537
        %v551 = vrsqrt.pop %v538
        %v552 = vrsqrt.pop %v539
        %v553 = vrsqrt.pop %v540
        %v554 = vrsqrt.pop %v541
        %v555 = vmul.f32 %v438, %v542
        %v556 = vmul.f32 %v439, %v543
        %v557 = vmul.f32 %v440, %v544
        %v558 = vmul.f32 %v441, %v545
        %v559 = vmul.f32 %v442, %v546
        %v560 = vmul.f32 %v443, %v547
        %v561 = vmul.f32 %v444, %v548
        %v562 = vmul.f32 %v445, %v549
        %v563 = vmul.f32 %v446, %v550
        %v564 = vmul.f32 %v447, %v551
        %v565 = vmul.f32 %v448, %v552
        %v566 = vmul.f32 %v449, %v553
        %v567 = vmul.f32 %v450, %v554
        %v569 = vlaneseq
        %v570 = vshrl.u32 %v569, 7
        %v571 = vsub.s32 0, %v570
        %v572 = vrot.slane %v369, %v571
        %v574 = vmul.f32 %v555, %v572
        %v575 = vmul.f32 %v556, %v572
        %v576 = vmul.f32 %v557, %v572
        %v577 = vmul.f32 %v558, %v572
        %v578 = vmul.f32 %v559, %v572
        %v579 = vmul.f32 %v560, %v572
        %v580 = vmul.f32 %v561, %v572
        %v581 = vmul.f32 %v562, %v572
        %v582 = vmul.f32 %v563, %v572
        %v583 = vmul.f32 %v564, %v572
        %v584 = vmul.f32 %v565, %v572
        %v585 = vmul.f32 %v566, %v572
        %v586 = vmul.f32 %v567, %v572
        %v588 = vlaneseq
        %v589 = vshrl.u32 %v588, 7
        %v590 = vsub.s32 0, %v589
        %v591 = vrot.slane %v370, %v590
        %v593 = vadd.f32 %v574, %v591
        %v594 = vadd.f32 %v575, %v591
        %v595 = vadd.f32 %v576, %v591
        %v596 = vadd.f32 %v577, %v591
        %v597 = vadd.f32 %v578, %v591
        %v598 = vadd.f32 %v579, %v591
        %v599 = vadd.f32 %v580, %v591
        %v600 = vadd.f32 %v581, %v591
        %v601 = vadd.f32 %v582, %v591
        %v602 = vadd.f32 %v583, %v591
        %v603 = vadd.f32 %v584, %v591
        %v604 = vadd.f32 %v585, %v591
        %v605 = vadd.f32 %v586, %v591
        %v606 = vld [vmem:[#allocation2] sm:$0xff]
        %v607 = vld [vmem:[#allocation2 + $0x8] sm:$0xff]
        %v608 = vld [vmem:[#allocation2 + $0x10] sm:$0xff]
        %v609 = vld [vmem:[#allocation2 + $0x18] sm:$0xff]
        %v610 = vld [vmem:[%s4] sm:$0x1]
        %v612 = vlaneseq
        %v613 = vshrl.u32 %v612, 7
        %v614 = vsub.s32 0, %v613
        %v615 = vrot.slane %v610, %v614
        %v618 = vsel %vm384, %v593, 0
        %v621 = vsel %vm384, %v594, 0
        %v624 = vsel %vm384, %v595, 0
        %v627 = vsel %vm384, %v596, 0
        %v630 = vsel %vm384, %v597, 0
        %v633 = vsel %vm384, %v598, 0
        %v636 = vsel %vm384, %v599, 0
        %v639 = vsel %vm384, %v600, 0
        %v642 = vsel %vm384, %v601, 0
        %v645 = vsel %vm384, %v602, 0
        %v648 = vsel %vm384, %v603, 0
        %v651 = vsel %vm384, %v604, 0
        %v654 = vsel %vm384, %v605, 0
        %656 = vmatprep.subr.mxu0 0.0
        %657 = vmatpush1.msra.mxu0 %v606
        %658 = vmatprep.subr.mxu0 0.0
        %659 = vmatpush1.msra.mxu0 %v607
        %660 = vmatprep.subr.mxu0 0.0
        %661 = vmatpush1.msra.mxu0 %v608
        %662 = vmatprep.subr.mxu0 0.0
        %663 = vmatpush1.msra.mxu0 %v609
        %664 = vmatprep.subr.mxu0 0.0
        %665 = vmatpush1.msra.mxu0 0.0
        %666 = vmatprep.subr.mxu0 0.0
        %667 = vmatpush1.msra.mxu0 0.0
        %668 = vmatprep.subr.mxu0 0.0
        %669 = vmatpush1.msra.mxu0 0.0
        %670 = vmatprep.subr.mxu0 0.0
        %671 = vmatpush1.msra.mxu0 0.0
        %672 = vmatprep.subr.mxu0 0.0
        %673 = vmatpush1.msra.mxu0 0.0
        %674 = vmatprep.subr.mxu0 0.0
        %675 = vmatpush1.msra.mxu0 0.0
        %676 = vmatprep.subr.mxu0 0.0
        %677 = vmatpush1.msra.mxu0 0.0
        %678 = vmatprep.subr.mxu0 0.0
        %679 = vmatpush1.msra.mxu0 0.0
        %680 = vmatprep.subr.mxu0 0.0
        %681 = vmatpush1.msra.mxu0 0.0
        %682 = vmatprep.subr.mxu0 0.0
        %683 = vmatpush1.msra.mxu0 0.0
        %684 = vmatprep.subr.mxu0 0.0
        %685 = vmatpush1.msra.mxu0 0.0
        %686 = vmatprep.subr.mxu0 0.0
        %687 = vmatpush1.msra.mxu0 0.0
        %688 = vmatprep.subr.mxu0 0.0
        %689 = vmatpush1.msra.mxu0 0.0
        %690 = vmatprep.subr.mxu0 0.0
        %691 = vmatpush1.msra.mxu0 0.0
        %692 = vmatprep.subr.mxu0 0.0
        %693 = vmatpush1.msra.mxu0 0.0
        %694 = vmatprep.subr.mxu0 0.0
        %695 = vmatpush1.msra.mxu0 0.0
        %696 = vmatprep.subr.mxu0 0.0
        %697 = vmatpush1.msra.mxu0 0.0
        %698 = vmatprep.subr.mxu0 0.0
        %699 = vmatpush1.msra.mxu0 0.0
        %700 = vmatprep.subr.mxu0 0.0
        %701 = vmatpush1.msra.mxu0 0.0
        %702 = vmatprep.subr.mxu0 0.0
        %703 = vmatpush1.msra.mxu0 0.0
        %704 = vmatprep.subr.mxu0 0.0
        %705 = vmatpush1.msra.mxu0 0.0
        %706 = vmatprep.subr.mxu0 0.0
        %707 = vmatpush1.msra.mxu0 0.0
        %708 = vmatprep.subr.mxu0 0.0
        %709 = vmatpush1.msra.mxu0 0.0
        %710 = vmatprep.subr.mxu0 0.0
        %711 = vmatpush1.msra.mxu0 0.0
        %712 = vmatprep.subr.mxu0 0.0
        %713 = vmatpush1.msra.mxu0 0.0
        %714 = vmatprep.subr.mxu0 0.0
        %715 = vmatpush1.msra.mxu0 0.0
        %716 = vmatprep.subr.mxu0 0.0
        %717 = vmatpush1.msra.mxu0 0.0
        %718 = vmatprep.subr.mxu0 0.0
        %719 = vmatpush1.msra.mxu0 0.0
        %720 = vmatprep.mubr.f32.mxu0 0.0
        %721 = vmatmul.mubr.f32.gmra.mrb[0].mxu0 %v618
        %v722 = vpop.f32.mrb[0].mxu0
        %v723 = vadd.f32 %v615, %v722
        %v724 = vpop.f32.mrb[0].mxu0
        %725 = vmatprep.mubr.f32.mxu0 0.0
        %726 = vmatmul.mubr.f32.gmra.mrb[0].mxu0 %v621
        %v727 = vpop.f32.mrb[0].mxu0
        %v728 = vadd.f32 %v615, %v727
        %v729 = vpop.f32.mrb[0].mxu0
        %730 = vmatprep.mubr.f32.mxu0 0.0
        %731 = vmatmul.mubr.f32.gmra.mrb[0].mxu0 %v624
        %v732 = vpop.f32.mrb[0].mxu0
        %v733 = vadd.f32 %v615, %v732
        %v734 = vpop.f32.mrb[0].mxu0
        %735 = vmatprep.mubr.f32.mxu0 0.0
        %736 = vmatmul.mubr.f32.gmra.mrb[0].mxu0 %v627
        %v737 = vpop.f32.mrb[0].mxu0
        %v738 = vadd.f32 %v615, %v737
        %v739 = vpop.f32.mrb[0].mxu0
        %740 = vmatprep.mubr.f32.mxu0 0.0
        %741 = vmatmul.mubr.f32.gmra.mrb[0].mxu0 %v630
        %v742 = vpop.f32.mrb[0].mxu0
        %v743 = vadd.f32 %v615, %v742
        %v744 = vpop.f32.mrb[0].mxu0
        %745 = vmatprep.mubr.f32.mxu0 0.0
        %746 = vmatmul.mubr.f32.gmra.mrb[0].mxu0 %v633
        %v747 = vpop.f32.mrb[0].mxu0
        %v748 = vadd.f32 %v615, %v747
        %v749 = vpop.f32.mrb[0].mxu0
        %750 = vmatprep.mubr.f32.mxu0 0.0
        %751 = vmatmul.mubr.f32.gmra.mrb[0].mxu0 %v636
        %v752 = vpop.f32.mrb[0].mxu0
        %v753 = vadd.f32 %v615, %v752
        %v754 = vpop.f32.mrb[0].mxu0
        %755 = vmatprep.mubr.f32.mxu0 0.0
        %756 = vmatmul.mubr.f32.gmra.mrb[0].mxu0 %v639
        %v757 = vpop.f32.mrb[0].mxu0
        %v758 = vadd.f32 %v615, %v757
        %v759 = vpop.f32.mrb[0].mxu0
        %760 = vmatprep.mubr.f32.mxu0 0.0
        %761 = vmatmul.mubr.f32.gmra.mrb[0].mxu0 %v642
        %v762 = vpop.f32.mrb[0].mxu0
        %v763 = vadd.f32 %v615, %v762
        %v764 = vpop.f32.mrb[0].mxu0
        %765 = vmatprep.mubr.f32.mxu0 0.0
        %766 = vmatmul.mubr.f32.gmra.mrb[0].mxu0 %v645
        %v767 = vpop.f32.mrb[0].mxu0
        %v768 = vadd.f32 %v615, %v767
        %v769 = vpop.f32.mrb[0].mxu0
        %770 = vmatprep.mubr.f32.mxu0 0.0
        %771 = vmatmul.mubr.f32.gmra.mrb[0].mxu0 %v648
        %v772 = vpop.f32.mrb[0].mxu0
        %v773 = vadd.f32 %v615, %v772
        %v774 = vpop.f32.mrb[0].mxu0
        %775 = vmatprep.mubr.f32.mxu0 0.0
        %776 = vmatmul.mubr.f32.gmra.mrb[0].mxu0 %v651
        %v777 = vpop.f32.mrb[0].mxu0
        %v778 = vadd.f32 %v615, %v777
        %v779 = vpop.f32.mrb[0].mxu0
        %780 = vmatprep.mubr.f32.mxu0 0.0
        %781 = vmatmul.mubr.f32.gmra.mrb[0].mxu0 %v654
        %v782 = vpop.f32.mrb[0].mxu0
        %v783 = vadd.f32 %v615, %v782
        %v784 = vpop.f32.mrb[0].mxu0
        %785 = vdwg.mxu0
        %v786 = vmax.f32 %v723, 0.0
        %v787 = vmax.f32 %v728, 0.0
        %v788 = vmax.f32 %v733, 0.0
        %v789 = vmax.f32 %v738, 0.0
        %v790 = vmax.f32 %v743, 0.0
        %v791 = vmax.f32 %v748, 0.0
        %v792 = vmax.f32 %v753, 0.0
        %v793 = vmax.f32 %v758, 0.0
        %v794 = vmax.f32 %v763, 0.0
        %v795 = vmax.f32 %v768, 0.0
        %v796 = vmax.f32 %v773, 0.0
        %v797 = vmax.f32 %v778, 0.0
        %v798 = vmax.f32 %v783, 0.0
        %v799 = vld [vmem:[%s5] sm:$0xff]
        %v800 = vld [vmem:[%s5 + $0x8] sm:$0xff]
        %v801 = vld [vmem:[%s5 + $0x10] sm:$0xff]
        %v802 = vld [vmem:[%s5 + $0x18] sm:$0xff]
        %v803 = vld [vmem:[%s5 + $0x20] sm:$0xff]
        %v804 = vld [vmem:[%s5 + $0x28] sm:$0xff]
        %v805 = vld [vmem:[%s5 + $0x30] sm:$0xff]
        %v806 = vld [vmem:[%s5 + $0x38] sm:$0xff]
        %v807 = vld [vmem:[%s5 + $0x40] sm:$0xff]
        %v808 = vld [vmem:[%s5 + $0x48] sm:$0xff]
        %v809 = vld [vmem:[%s5 + $0x50] sm:$0xff]
        %v810 = vld [vmem:[%s5 + $0x58] sm:$0xff]
        %v811 = vld [vmem:[%s5 + $0x60] sm:$0xff]
        %v812 = vld [vmem:[%s5 + $0x68] sm:$0xff]
        %v813 = vld [vmem:[%s5 + $0x70] sm:$0xff]
        %v814 = vld [vmem:[%s5 + $0x78] sm:$0xff]
        %v815 = vld [vmem:[%s6] sm:$0x1]
        %v817 = vlaneseq
        %v818 = vshrl.u32 %v817, 7
        %v819 = vsub.s32 0, %v818
        %v820 = vrot.slane %v815, %v819
        %822 = vmatprep.subr.mxu0 0.0
        %823 = vmatpush1.msra.mxu0 %v799
        %824 = vmatprep.subr.mxu0 0.0
        %825 = vmatpush1.msra.mxu0 %v800
        %826 = vmatprep.subr.mxu0 0.0
        %827 = vmatpush1.msra.mxu0 %v801
        %828 = vmatprep.subr.mxu0 0.0
        %829 = vmatpush1.msra.mxu0 %v802
        %830 = vmatprep.subr.mxu0 0.0
        %831 = vmatpush1.msra.mxu0 %v803
        %832 = vmatprep.subr.mxu0 0.0
        %833 = vmatpush1.msra.mxu0 %v804
        %834 = vmatprep.subr.mxu0 0.0
        %835 = vmatpush1.msra.mxu0 %v805
        %836 = vmatprep.subr.mxu0 0.0
        %837 = vmatpush1.msra.mxu0 %v806
        %838 = vmatprep.subr.mxu0 0.0
        %839 = vmatpush1.msra.mxu0 %v807
        %840 = vmatprep.subr.mxu0 0.0
        %841 = vmatpush1.msra.mxu0 %v808
        %842 = vmatprep.subr.mxu0 0.0
        %843 = vmatpush1.msra.mxu0 %v809
        %844 = vmatprep.subr.mxu0 0.0
        %845 = vmatpush1.msra.mxu0 %v810
        %846 = vmatprep.subr.mxu0 0.0
        %847 = vmatpush1.msra.mxu0 %v811
        %848 = vmatprep.subr.mxu0 0.0
        %849 = vmatpush1.msra.mxu0 %v812
        %850 = vmatprep.subr.mxu0 0.0
        %851 = vmatpush1.msra.mxu0 %v813
        %852 = vmatprep.subr.mxu0 0.0
        %853 = vmatpush1.msra.mxu0 %v814
        %854 = vmatprep.subr.mxu0 0.0
        %855 = vmatpush1.msra.mxu0 0.0
        %856 = vmatprep.subr.mxu0 0.0
        %857 = vmatpush1.msra.mxu0 0.0
        %858 = vmatprep.subr.mxu0 0.0
        %859 = vmatpush1.msra.mxu0 0.0
        %860 = vmatprep.subr.mxu0 0.0
        %861 = vmatpush1.msra.mxu0 0.0
        %862 = vmatprep.subr.mxu0 0.0
        %863 = vmatpush1.msra.mxu0 0.0
        %864 = vmatprep.subr.mxu0 0.0
        %865 = vmatpush1.msra.mxu0 0.0
        %866 = vmatprep.subr.mxu0 0.0
        %867 = vmatpush1.msra.mxu0 0.0
        %868 = vmatprep.subr.mxu0 0.0
        %869 = vmatpush1.msra.mxu0 0.0
        %870 = vmatprep.subr.mxu0 0.0
        %871 = vmatpush1.msra.mxu0 0.0
        %872 = vmatprep.subr.mxu0 0.0
        %873 = vmatpush1.msra.mxu0 0.0
        %874 = vmatprep.subr.mxu0 0.0
        %875 = vmatpush1.msra.mxu0 0.0
        %876 = vmatprep.subr.mxu0 0.0
        %877 = vmatpush1.msra.mxu0 0.0
        %878 = vmatprep.subr.mxu0 0.0
        %879 = vmatpush1.msra.mxu0 0.0
        %880 = vmatprep.subr.mxu0 0.0
        %881 = vmatpush1.msra.mxu0 0.0
        %882 = vmatprep.subr.mxu0 0.0
        %883 = vmatpush1.msra.mxu0 0.0
        %884 = vmatprep.subr.mxu0 0.0
        %885 = vmatpush1.msra.mxu0 0.0
        %886 = vmatprep.mubr.f32.mxu0 0.0
        %887 = vmatmul.mubr.f32.gmra.mrb[0].mxu0 %v786
        %v888 = vpop.f32.mrb[0].mxu0
        %v889 = vadd.f32 %v820, %v888
        %v890 = vpop.f32.mrb[0].mxu0
        %891 = vmatprep.mubr.f32.mxu0 0.0
        %892 = vmatmul.mubr.f32.gmra.mrb[0].mxu0 %v787
        %v893 = vpop.f32.mrb[0].mxu0
        %v894 = vadd.f32 %v820, %v893
        %v895 = vpop.f32.mrb[0].mxu0
        %896 = vmatprep.mubr.f32.mxu0 0.0
        %897 = vmatmul.mubr.f32.gmra.mrb[0].mxu0 %v788
        %v898 = vpop.f32.mrb[0].mxu0
        %v899 = vadd.f32 %v820, %v898
        %v900 = vpop.f32.mrb[0].mxu0
        %901 = vmatprep.mubr.f32.mxu0 0.0
        %902 = vmatmul.mubr.f32.gmra.mrb[0].mxu0 %v789
        %v903 = vpop.f32.mrb[0].mxu0
        %v904 = vadd.f32 %v820, %v903
        %v905 = vpop.f32.mrb[0].mxu0
        %906 = vmatprep.mubr.f32.mxu0 0.0
        %907 = vmatmul.mubr.f32.gmra.mrb[0].mxu0 %v790
        %v908 = vpop.f32.mrb[0].mxu0
        %v909 = vadd.f32 %v820, %v908
        %v910 = vpop.f32.mrb[0].mxu0
        %911 = vmatprep.mubr.f32.mxu0 0.0
        %912 = vmatmul.mubr.f32.gmra.mrb[0].mxu0 %v791
        %v913 = vpop.f32.mrb[0].mxu0
        %v914 = vadd.f32 %v820, %v913
        %v915 = vpop.f32.mrb[0].mxu0
        %916 = vmatprep.mubr.f32.mxu0 0.0
        %917 = vmatmul.mubr.f32.gmra.mrb[0].mxu0 %v792
        %v918 = vpop.f32.mrb[0].mxu0
        %v919 = vadd.f32 %v820, %v918
        %v920 = vpop.f32.mrb[0].mxu0
        %921 = vmatprep.mubr.f32.mxu0 0.0
        %922 = vmatmul.mubr.f32.gmra.mrb[0].mxu0 %v793
        %v923 = vpop.f32.mrb[0].mxu0
        %v924 = vadd.f32 %v820, %v923
        %v925 = vpop.f32.mrb[0].mxu0
        %926 = vmatprep.mubr.f32.mxu0 0.0
        %927 = vmatmul.mubr.f32.gmra.mrb[0].mxu0 %v794
        %v928 = vpop.f32.mrb[0].mxu0
        %v929 = vadd.f32 %v820, %v928
        %v930 = vpop.f32.mrb[0].mxu0
        %931 = vmatprep.mubr.f32.mxu0 0.0
        %932 = vmatmul.mubr.f32.gmra.mrb[0].mxu0 %v795
        %v933 = vpop.f32.mrb[0].mxu0
        %v934 = vadd.f32 %v820, %v933
        %v935 = vpop.f32.mrb[0].mxu0
        %936 = vmatprep.mubr.f32.mxu0 0.0
        %937 = vmatmul.mubr.f32.gmra.mrb[0].mxu0 %v796
        %v938 = vpop.f32.mrb[0].mxu0
        %v939 = vadd.f32 %v820, %v938
        %v940 = vpop.f32.mrb[0].mxu0
        %941 = vmatprep.mubr.f32.mxu0 0.0
        %942 = vmatmul.mubr.f32.gmra.mrb[0].mxu0 %v797
        %v943 = vpop.f32.mrb[0].mxu0
        %v944 = vadd.f32 %v820, %v943
        %v945 = vpop.f32.mrb[0].mxu0
        %946 = vmatprep.mubr.f32.mxu0 0.0
        %947 = vmatmul.mubr.f32.gmra.mrb[0].mxu0 %v798
        %v948 = vpop.f32.mrb[0].mxu0
        %v949 = vadd.f32 %v820, %v948
        %v950 = vpop.f32.mrb[0].mxu0
        %951 = vdwg.mxu0
        %v952 = vmax.f32 %v889, 0.0
        %v953 = vmax.f32 %v894, 0.0
        %v954 = vmax.f32 %v899, 0.0
        %v955 = vmax.f32 %v904, 0.0
        %v956 = vmax.f32 %v909, 0.0
        %v957 = vmax.f32 %v914, 0.0
        %v958 = vmax.f32 %v919, 0.0
        %v959 = vmax.f32 %v924, 0.0
        %v960 = vmax.f32 %v929, 0.0
        %v961 = vmax.f32 %v934, 0.0
        %v962 = vmax.f32 %v939, 0.0
        %v963 = vmax.f32 %v944, 0.0
        %v964 = vmax.f32 %v949, 0.0
        %v965 = vld [vmem:[%s7] sm:$0xff]
        %v966 = vld [vmem:[%s7 + $0x8] sm:$0xff]
        %v967 = vld [vmem:[%s7 + $0x10] sm:$0xff]
        %v968 = vld [vmem:[%s7 + $0x18] sm:$0xff]
        %v969 = vld [vmem:[%s7 + $0x20] sm:$0xff]
        %v970 = vld [vmem:[%s7 + $0x28] sm:$0xff]
        %v971 = vld [vmem:[%s7 + $0x30] sm:$0xff]
        %v972 = vld [vmem:[%s7 + $0x38] sm:$0xff]
        %v973 = vld [vmem:[%s7 + $0x40] sm:$0xff]
        %v974 = vld [vmem:[%s7 + $0x48] sm:$0xff]
        %v975 = vld [vmem:[%s7 + $0x50] sm:$0xff]
        %v976 = vld [vmem:[%s7 + $0x58] sm:$0xff]
        %v977 = vld [vmem:[%s7 + $0x60] sm:$0xff]
        %v978 = vld [vmem:[%s7 + $0x68] sm:$0xff]
        %v979 = vld [vmem:[%s7 + $0x70] sm:$0xff]
        %v980 = vld [vmem:[%s7 + $0x78] sm:$0xff]
        %v981 = vld [vmem:[%s8] sm:$0x1]
        %v983 = vlaneseq
        %v984 = vshrl.u32 %v983, 7
        %v985 = vsub.s32 0, %v984
        %v986 = vrot.slane %v981, %v985
        %988 = vmatprep.subr.mxu0 0.0
        %989 = vmatpush1.msra.mxu0 %v965
        %990 = vmatprep.subr.mxu0 0.0
        %991 = vmatpush1.msra.mxu0 %v966
        %992 = vmatprep.subr.mxu0 0.0
        %993 = vmatpush1.msra.mxu0 %v967
        %994 = vmatprep.subr.mxu0 0.0
        %995 = vmatpush1.msra.mxu0 %v968
        %996 = vmatprep.subr.mxu0 0.0
        %997 = vmatpush1.msra.mxu0 %v969
        %998 = vmatprep.subr.mxu0 0.0
        %999 = vmatpush1.msra.mxu0 %v970
        %1000 = vmatprep.subr.mxu0 0.0
        %1001 = vmatpush1.msra.mxu0 %v971
        %1002 = vmatprep.subr.mxu0 0.0
        %1003 = vmatpush1.msra.mxu0 %v972
        %1004 = vmatprep.subr.mxu0 0.0
        %1005 = vmatpush1.msra.mxu0 %v973
        %1006 = vmatprep.subr.mxu0 0.0
        %1007 = vmatpush1.msra.mxu0 %v974
        %1008 = vmatprep.subr.mxu0 0.0
        %1009 = vmatpush1.msra.mxu0 %v975
        %1010 = vmatprep.subr.mxu0 0.0
        %1011 = vmatpush1.msra.mxu0 %v976
        %1012 = vmatprep.subr.mxu0 0.0
        %1013 = vmatpush1.msra.mxu0 %v977
        %1014 = vmatprep.subr.mxu0 0.0
        %1015 = vmatpush1.msra.mxu0 %v978
        %1016 = vmatprep.subr.mxu0 0.0
        %1017 = vmatpush1.msra.mxu0 %v979
        %1018 = vmatprep.subr.mxu0 0.0
        %1019 = vmatpush1.msra.mxu0 %v980
        %1020 = vmatprep.subr.mxu0 0.0
        %1021 = vmatpush1.msra.mxu0 0.0
        %1022 = vmatprep.subr.mxu0 0.0
        %1023 = vmatpush1.msra.mxu0 0.0
        %1024 = vmatprep.subr.mxu0 0.0
        %1025 = vmatpush1.msra.mxu0 0.0
        %1026 = vmatprep.subr.mxu0 0.0
        %1027 = vmatpush1.msra.mxu0 0.0
        %1028 = vmatprep.subr.mxu0 0.0
        %1029 = vmatpush1.msra.mxu0 0.0
        %1030 = vmatprep.subr.mxu0 0.0
        %1031 = vmatpush1.msra.mxu0 0.0
        %1032 = vmatprep.subr.mxu0 0.0
        %1033 = vmatpush1.msra.mxu0 0.0
        %1034 = vmatprep.subr.mxu0 0.0
        %1035 = vmatpush1.msra.mxu0 0.0
        %1036 = vmatprep.subr.mxu0 0.0
        %1037 = vmatpush1.msra.mxu0 0.0
        %1038 = vmatprep.subr.mxu0 0.0
        %1039 = vmatpush1.msra.mxu0 0.0
        %1040 = vmatprep.subr.mxu0 0.0
        %1041 = vmatpush1.msra.mxu0 0.0
        %1042 = vmatprep.subr.mxu0 0.0
        %1043 = vmatpush1.msra.mxu0 0.0
        %1044 = vmatprep.subr.mxu0 0.0
        %1045 = vmatpush1.msra.mxu0 0.0
        %1046 = vmatprep.subr.mxu0 0.0
        %1047 = vmatpush1.msra.mxu0 0.0
        %1048 = vmatprep.subr.mxu0 0.0
        %1049 = vmatpush1.msra.mxu0 0.0
        %1050 = vmatprep.subr.mxu0 0.0
        %1051 = vmatpush1.msra.mxu0 0.0
        %1052 = vmatprep.mubr.f32.mxu0 0.0
        %1053 = vmatmul.mubr.f32.gmra.mrb[0].mxu0 %v952
        %v1054 = vpop.f32.mrb[0].mxu0
        %v1055 = vadd.f32 %v986, %v1054
        %v1056 = vpop.f32.mrb[0].mxu0
        %1057 = vmatprep.mubr.f32.mxu0 0.0
        %1058 = vmatmul.mubr.f32.gmra.mrb[0].mxu0 %v953
        %v1059 = vpop.f32.mrb[0].mxu0
        %v1060 = vadd.f32 %v986, %v1059
        %v1061 = vpop.f32.mrb[0].mxu0
        %1062 = vmatprep.mubr.f32.mxu0 0.0
        %1063 = vmatmul.mubr.f32.gmra.mrb[0].mxu0 %v954
        %v1064 = vpop.f32.mrb[0].mxu0
        %v1065 = vadd.f32 %v986, %v1064
        %v1066 = vpop.f32.mrb[0].mxu0
        %1067 = vmatprep.mubr.f32.mxu0 0.0
        %1068 = vmatmul.mubr.f32.gmra.mrb[0].mxu0 %v955
        %v1069 = vpop.f32.mrb[0].mxu0
        %v1070 = vadd.f32 %v986, %v1069
        %v1071 = vpop.f32.mrb[0].mxu0
        %1072 = vmatprep.mubr.f32.mxu0 0.0
        %1073 = vmatmul.mubr.f32.gmra.mrb[0].mxu0 %v956
        %v1074 = vpop.f32.mrb[0].mxu0
        %v1075 = vadd.f32 %v986, %v1074
        %v1076 = vpop.f32.mrb[0].mxu0
        %1077 = vmatprep.mubr.f32.mxu0 0.0
        %1078 = vmatmul.mubr.f32.gmra.mrb[0].mxu0 %v957
        %v1079 = vpop.f32.mrb[0].mxu0
        %v1080 = vadd.f32 %v986, %v1079
        %v1081 = vpop.f32.mrb[0].mxu0
        %1082 = vmatprep.mubr.f32.mxu0 0.0
        %1083 = vmatmul.mubr.f32.gmra.mrb[0].mxu0 %v958
        %v1084 = vpop.f32.mrb[0].mxu0
        %v1085 = vadd.f32 %v986, %v1084
        %v1086 = vpop.f32.mrb[0].mxu0
        %1087 = vmatprep.mubr.f32.mxu0 0.0
        %1088 = vmatmul.mubr.f32.gmra.mrb[0].mxu0 %v959
        %v1089 = vpop.f32.mrb[0].mxu0
        %v1090 = vadd.f32 %v986, %v1089
        %v1091 = vpop.f32.mrb[0].mxu0
        %1092 = vmatprep.mubr.f32.mxu0 0.0
        %1093 = vmatmul.mubr.f32.gmra.mrb[0].mxu0 %v960
        %v1094 = vpop.f32.mrb[0].mxu0
        %v1095 = vadd.f32 %v986, %v1094
        %v1096 = vpop.f32.mrb[0].mxu0
        %1097 = vmatprep.mubr.f32.mxu0 0.0
        %1098 = vmatmul.mubr.f32.gmra.mrb[0].mxu0 %v961
        %v1099 = vpop.f32.mrb[0].mxu0
        %v1100 = vadd.f32 %v986, %v1099
        %v1101 = vpop.f32.mrb[0].mxu0
        %1102 = vmatprep.mubr.f32.mxu0 0.0
        %1103 = vmatmul.mubr.f32.gmra.mrb[0].mxu0 %v962
        %v1104 = vpop.f32.mrb[0].mxu0
        %v1105 = vadd.f32 %v986, %v1104
        %v1106 = vpop.f32.mrb[0].mxu0
        %1107 = vmatprep.mubr.f32.mxu0 0.0
        %1108 = vmatmul.mubr.f32.gmra.mrb[0].mxu0 %v963
        %v1109 = vpop.f32.mrb[0].mxu0
        %v1110 = vadd.f32 %v986, %v1109
        %v1111 = vpop.f32.mrb[0].mxu0
        %1112 = vmatprep.mubr.f32.mxu0 0.0
        %1113 = vmatmul.mubr.f32.gmra.mrb[0].mxu0 %v964
        %v1114 = vpop.f32.mrb[0].mxu0
        %v1115 = vadd.f32 %v986, %v1114
        %v1116 = vpop.f32.mrb[0].mxu0
        %1117 = vdwg.mxu0
        %1118 = vst [vmem:[%s349] sm:$0xff] %v1055
        %1119 = vst [vmem:[%s349 + $0x8] sm:$0xff] %v1060
        %1120 = vst [vmem:[%s349 + $0x10] sm:$0xff] %v1065
        %1121 = vst [vmem:[%s349 + $0x18] sm:$0xff] %v1070
        %1122 = vst [vmem:[%s349 + $0x20] sm:$0xff] %v1075
        %1123 = vst [vmem:[%s349 + $0x28] sm:$0xff] %v1080
        %1124 = vst [vmem:[%s349 + $0x30] sm:$0xff] %v1085
        %1125 = vst [vmem:[%s349 + $0x38] sm:$0xff] %v1090
        %1126 = vst [vmem:[%s349 + $0x40] sm:$0xff] %v1095
        %1127 = vst [vmem:[%s349 + $0x48] sm:$0xff] %v1100
        %1128 = vst [vmem:[%s349 + $0x50] sm:$0xff] %v1105
        %1129 = vst [vmem:[%s349 + $0x58] sm:$0xff] %v1110
        %1130 = vst [vmem:[%s349 + $0x60] sm:$0xff] %v1115
        %s1131 = sand.u32 %s223, 1
        %s1132 = sand.u32 %s223, 1
        %s1133 = smul.addr %s1132, 104
        %s1134 = scalar_lea.vmem [#allocation4], %s1133
        // Predicated region
        $region61: #{mlp_forward.1} parent=55 // pred_check
          %p1135 = pneg %p233
        $region62: #{mlp_forward.1} parent=55 // pred_check_branch
          %1137 = sbr.rel (%p1135) target = $region64
        $region63: #{mlp_forward.1} parent=55 // pred_region
          %s1138 = smul.u32 13, %s21
          %s1139 = ssub.s32 25, %s1138
          %p1140 = scmp.lt.s32.totalorder %s1139, 13
          %s1141 = scalar_select %p1140, %s1139, 13
          %s1142 = smul.u32 128, %s1141
          %p1143 = scmp.ne.s32.totalorder 0, %s1142
          %s1144 = smul.addr %s1138, 8
          %s1145 = scalar_lea.vmem %s9, %s1144
          // Predicated region
          $region65: #{mlp_forward.1} parent=63 // pred_check
            %p1146 = pneg %p1143
          $region66: #{mlp_forward.1} parent=63 // pred_check_branch
            %1148 = sbr.rel (%p1146) target = $region68
          $region67: #{mlp_forward.1} parent=63 // pred_region
            // Predicated region
            $region69: #{mlp_forward.1} parent=67 // pred_check
              _
            $region70: #{mlp_forward.1} parent=67 // pred_check_branch
              %1150 = sbr.rel (0) target = $region72
            $region71: #{mlp_forward.1} parent=67 // pred_region
              // Predicated region
              $region91: #{mlp_forward.1} parent=71 // pred_check
                _
              $region92: #{mlp_forward.1} parent=71 // pred_check_branch
                %1224 = sbr.rel (0) target = $region94
              $region93: #{mlp_forward.1} parent=71 // pred_region
                %s1225 = sdiv.u32.pop %s1141, 13
                %s1226 = srem.u32.pop %s1141, 13
                // While loop
                $region95: #{mlp_forward.1} parent=93 // loop_pre_header
                  _
                $region96: #{mlp_forward.1} parent=93 // loop_header
                  %s1228 = sphi 0, %s1230
                  %p1229 = scmp.ge.s32.totalorder %s1228, %s1225
                  %s1233 = sphi 0, %s1264
                  %s1234 = sphi %s1134, %s1267
                  %s1235 = sphi %s1145, %s1268
                $region97: #{mlp_forward.1} parent=93 // loop_header_branch
                  %1232 = sbr.rel (%p1229) target = $region101
                $region98: #{mlp_forward.1} parent=93 // loop_body
                  %v1236 = vld [vmem:[%s1234] sm:$0xff]
                  %1237 = vst [vmem:[%s1235] sm:$0xff] %v1236
                  %v1238 = vld [vmem:[%s1234 + $0x8] sm:$0xff]
                  %1239 = vst [vmem:[%s1235 + $0x8] sm:$0xff] %v1238
                  %v1240 = vld [vmem:[%s1234 + $0x10] sm:$0xff]
                  %1241 = vst [vmem:[%s1235 + $0x10] sm:$0xff] %v1240
                  %v1242 = vld [vmem:[%s1234 + $0x18] sm:$0xff]
                  %1243 = vst [vmem:[%s1235 + $0x18] sm:$0xff] %v1242
                  %v1244 = vld [vmem:[%s1234 + $0x20] sm:$0xff]
                  %1245 = vst [vmem:[%s1235 + $0x20] sm:$0xff] %v1244
                  %v1246 = vld [vmem:[%s1234 + $0x28] sm:$0xff]
                  %1247 = vst [vmem:[%s1235 + $0x28] sm:$0xff] %v1246
                  %v1248 = vld [vmem:[%s1234 + $0x30] sm:$0xff]
                  %1249 = vst [vmem:[%s1235 + $0x30] sm:$0xff] %v1248
                  %v1250 = vld [vmem:[%s1234 + $0x38] sm:$0xff]
                  %1251 = vst [vmem:[%s1235 + $0x38] sm:$0xff] %v1250
                  %v1252 = vld [vmem:[%s1234 + $0x40] sm:$0xff]
                  %1253 = vst [vmem:[%s1235 + $0x40] sm:$0xff] %v1252
                  %v1254 = vld [vmem:[%s1234 + $0x48] sm:$0xff]
                  %1255 = vst [vmem:[%s1235 + $0x48] sm:$0xff] %v1254
                  %v1256 = vld [vmem:[%s1234 + $0x50] sm:$0xff]
                  %1257 = vst [vmem:[%s1235 + $0x50] sm:$0xff] %v1256
                  %v1258 = vld [vmem:[%s1234 + $0x58] sm:$0xff]
                  %1259 = vst [vmem:[%s1235 + $0x58] sm:$0xff] %v1258
                  %v1260 = vld [vmem:[%s1234 + $0x60] sm:$0xff]
                  %1261 = vst [vmem:[%s1235 + $0x60] sm:$0xff] %v1260
                  %s1262 = sadd.s32 1, %s1233
                  %p1263 = scmp.ge.s32.totalorder %s1262, %s1225
                  %s1264 = scalar_select %p1263, 0, %s1262
                  %s1265 = smul.u32 %s1264, 104
                  %s1266 = smul.u32 %s1264, 104
                  %s1267 = scalar_lea.vmem %s1134, %s1265 [#allocation4]
                  %s1268 = scalar_lea.vmem %s1145, %s1266
                $region99: #{mlp_forward.1} parent=93 // loop_footer
                  %s1230 = sadd.s32 %s1228, 1
                $region100: #{mlp_forward.1} parent=93 // loop_footer_branch
                  %1227 = sbr.rel target = $region96
                $region101: #{mlp_forward.1} parent=93 // loop_exit
                  _
                %s1269 = sdiv.u32.pop %s1141, 13
                %s1270 = srem.u32.pop %s1141, 13
                %s1271 = smul.u32 %s1269, 13
                %s1272 = smul.u32 8, %s1271
                %s1273 = scalar_lea.vmem %s1134, %s1272 [#allocation4]
                %s1274 = smul.u32 8, %s1271
                %s1275 = scalar_lea.vmem %s1145, %s1274
                // While loop
                $region102: #{mlp_forward.1} parent=93 // loop_pre_header
                  _
                $region103: #{mlp_forward.1} parent=93 // loop_header
                  %s1277 = sphi 0, %s1279
                  %p1278 = scmp.ge.s32.totalorder %s1277, %s1270
                  %s1282 = sphi 0, %s1289
                  %s1283 = sphi %s1273, %s1292
                  %s1284 = sphi %s1275, %s1293
                $region104: #{mlp_forward.1} parent=93 // loop_header_branch
                  %1281 = sbr.rel (%p1278) target = $region108
                $region105: #{mlp_forward.1} parent=93 // loop_body
                  %v1285 = vld [vmem:[%s1283] sm:$0xff]
                  %1286 = vst [vmem:[%s1284] sm:$0xff] %v1285
                  %s1287 = sadd.s32 1, %s1282
                  %p1288 = scmp.ge.s32.totalorder %s1287, %s1270
                  %s1289 = scalar_select %p1288, 0, %s1287
                  %s1290 = smul.u32 %s1289, 8
                  %s1291 = smul.u32 %s1289, 8
                  %s1292 = scalar_lea.vmem %s1273, %s1290 [#allocation4]
                  %s1293 = scalar_lea.vmem %s1275, %s1291
                $region106: #{mlp_forward.1} parent=93 // loop_footer
                  %s1279 = sadd.s32 %s1277, 1
                $region107: #{mlp_forward.1} parent=93 // loop_footer_branch
                  %1276 = sbr.rel target = $region103
                $region108: #{mlp_forward.1} parent=93 // loop_exit
                  _
              $region94: #{mlp_forward.1} parent=71 // pred_fallthru
                _
              // Predicated region
              $region109: #{mlp_forward.1} parent=71 // pred_check
                _
              $region110: #{mlp_forward.1} parent=71 // pred_check_branch
                %1295 = sbr.rel target = $region112
              $region111: #{mlp_forward.1} parent=71 // pred_region
                _
              $region112: #{mlp_forward.1} parent=71 // pred_fallthru
                _
            $region72: #{mlp_forward.1} parent=67 // pred_fallthru
              _
            // Predicated region
            $region73: #{mlp_forward.1} parent=67 // pred_check
              _
            $region74: #{mlp_forward.1} parent=67 // pred_check_branch
              %1152 = sbr.rel target = $region76
            $region75: #{mlp_forward.1} parent=67 // pred_region
              %s1154 = sdiv.u32.pop %s1141, 13
              %s1155 = srem.u32.pop %s1141, 13
              // While loop
              $region77: #{mlp_forward.1} parent=75 // loop_pre_header
                _
              $region78: #{mlp_forward.1} parent=75 // loop_header
                %s1157 = sphi 0, %s1159
                %p1158 = scmp.ge.s32.totalorder %s1157, %s1154
                %s1162 = sphi 0, %s1193
                %s1163 = sphi %s1134, %s1196
                %s1164 = sphi %s1145, %s1197
              $region79: #{mlp_forward.1} parent=75 // loop_header_branch
                %1161 = sbr.rel (%p1158) target = $region83
              $region80: #{mlp_forward.1} parent=75 // loop_body
                %v1165 = vld [vmem:[%s1163] sm:$0xff]
                %1166 = vst [vmem:[%s1164] sm:$0xff] %v1165
                %v1167 = vld [vmem:[%s1163 + $0x8] sm:$0xff]
                %1168 = vst [vmem:[%s1164 + $0x8] sm:$0xff] %v1167
                %v1169 = vld [vmem:[%s1163 + $0x10] sm:$0xff]
                %1170 = vst [vmem:[%s1164 + $0x10] sm:$0xff] %v1169
                %v1171 = vld [vmem:[%s1163 + $0x18] sm:$0xff]
                %1172 = vst [vmem:[%s1164 + $0x18] sm:$0xff] %v1171
                %v1173 = vld [vmem:[%s1163 + $0x20] sm:$0xff]
                %1174 = vst [vmem:[%s1164 + $0x20] sm:$0xff] %v1173
                %v1175 = vld [vmem:[%s1163 + $0x28] sm:$0xff]
                %1176 = vst [vmem:[%s1164 + $0x28] sm:$0xff] %v1175
                %v1177 = vld [vmem:[%s1163 + $0x30] sm:$0xff]
                %1178 = vst [vmem:[%s1164 + $0x30] sm:$0xff] %v1177
                %v1179 = vld [vmem:[%s1163 + $0x38] sm:$0xff]
                %1180 = vst [vmem:[%s1164 + $0x38] sm:$0xff] %v1179
                %v1181 = vld [vmem:[%s1163 + $0x40] sm:$0xff]
                %1182 = vst [vmem:[%s1164 + $0x40] sm:$0xff] %v1181
                %v1183 = vld [vmem:[%s1163 + $0x48] sm:$0xff]
                %1184 = vst [vmem:[%s1164 + $0x48] sm:$0xff] %v1183
                %v1185 = vld [vmem:[%s1163 + $0x50] sm:$0xff]
                %1186 = vst [vmem:[%s1164 + $0x50] sm:$0xff] %v1185
                %v1187 = vld [vmem:[%s1163 + $0x58] sm:$0xff]
                %1188 = vst [vmem:[%s1164 + $0x58] sm:$0xff] %v1187
                %v1189 = vld [vmem:[%s1163 + $0x60] sm:$0xff]
                %1190 = vst [vmem:[%s1164 + $0x60] sm:$0xff] %v1189
                %s1191 = sadd.s32 1, %s1162
                %p1192 = scmp.ge.s32.totalorder %s1191, %s1154
                %s1193 = scalar_select %p1192, 0, %s1191
                %s1194 = smul.u32 %s1193, 104
                %s1195 = smul.u32 %s1193, 104
                %s1196 = scalar_lea.vmem %s1134, %s1194 [#allocation4]
                %s1197 = scalar_lea.vmem %s1145, %s1195
              $region81: #{mlp_forward.1} parent=75 // loop_footer
                %s1159 = sadd.s32 %s1157, 1
              $region82: #{mlp_forward.1} parent=75 // loop_footer_branch
                %1156 = sbr.rel target = $region78
              $region83: #{mlp_forward.1} parent=75 // loop_exit
                _
              %s1198 = sdiv.u32.pop %s1141, 13
              %s1199 = srem.u32.pop %s1141, 13
              %s1200 = smul.u32 %s1198, 13
              %s1201 = smul.u32 8, %s1200
              %s1202 = scalar_lea.vmem %s1134, %s1201 [#allocation4]
              %s1203 = smul.u32 8, %s1200
              %s1204 = scalar_lea.vmem %s1145, %s1203
              // While loop
              $region84: #{mlp_forward.1} parent=75 // loop_pre_header
                _
              $region85: #{mlp_forward.1} parent=75 // loop_header
                %s1206 = sphi 0, %s1208
                %p1207 = scmp.ge.s32.totalorder %s1206, %s1199
                %s1211 = sphi 0, %s1218
                %s1212 = sphi %s1202, %s1221
                %s1213 = sphi %s1204, %s1222
              $region86: #{mlp_forward.1} parent=75 // loop_header_branch
                %1210 = sbr.rel (%p1207) target = $region90
              $region87: #{mlp_forward.1} parent=75 // loop_body
                %v1214 = vld [vmem:[%s1212] sm:$0xff]
                %1215 = vst [vmem:[%s1213] sm:$0xff] %v1214
                %s1216 = sadd.s32 1, %s1211
                %p1217 = scmp.ge.s32.totalorder %s1216, %s1199
                %s1218 = scalar_select %p1217, 0, %s1216
                %s1219 = smul.u32 %s1218, 8
                %s1220 = smul.u32 %s1218, 8
                %s1221 = scalar_lea.vmem %s1202, %s1219 [#allocation4]
                %s1222 = scalar_lea.vmem %s1204, %s1220
              $region88: #{mlp_forward.1} parent=75 // loop_footer
                %s1208 = sadd.s32 %s1206, 1
              $region89: #{mlp_forward.1} parent=75 // loop_footer_branch
                %1205 = sbr.rel target = $region85
              $region90: #{mlp_forward.1} parent=75 // loop_exit
                _
            $region76: #{mlp_forward.1} parent=67 // pred_fallthru
              _
          $region68: #{mlp_forward.1} parent=63 // pred_fallthru
            _
          %1296 = vnop
        $region64: #{mlp_forward.1} parent=55 // pred_fallthru
          _
      $region56: #{mlp_forward.1} parent=5 // pred_fallthru
        _
      %p1297 = scmp.le.s32.totalorder 2, %s16
      // Predicated region
      $region113: #{mlp_forward.1} parent=5 // pred_check
        %p1298 = pneg %p1297
      $region114: #{mlp_forward.1} parent=5 // pred_check_branch
        %1300 = sbr.rel (%p1298) target = $region116
      $region115: #{mlp_forward.1} parent=5 // pred_region
        %s1301 = ssub.s32 %s16, 2
        // Predicated region
        $region117: #{mlp_forward.1} parent=115 // pred_check
          %p1302 = pneg %p239
        $region118: #{mlp_forward.1} parent=115 // pred_check_branch
          %1304 = sbr.rel (%p1302) target = $region120
        $region119: #{mlp_forward.1} parent=115 // pred_region
          %s1305 = sand.u32 %s224, 1
          %s1306 = sand.u32 %s224, 1
          %s1307 = smul.addr %s1306, 104
          %s1308 = scalar_lea.vmem [#allocation4], %s1307
        $region120: #{mlp_forward.1} parent=115 // pred_fallthru
          _
      $region116: #{mlp_forward.1} parent=5 // pred_fallthru
        _
    $region6: #{mlp_forward.1} parent=1 // loop_footer
      %s20 = sadd.s32 1, %s16
    $region7: #{mlp_forward.1} parent=1 // loop_footer_branch
      %15 = sbr.rel target = $region3
    $region8: #{mlp_forward.1} parent=1 // loop_exit
      _
    %1309 = vsyncpa [#allocation3], 1
    %s1310 = scalar_lea.sflag [#allocation3], 1
    %1311 = vsyncpa %s1310, 1

</llo_original>
